<compile_context>
chip_gen: v7x
topology: tpu7x:2x2x1
jax: 0.10.0
libtpu: 0.0.40
codegen_flags: <defaults>
</compile_context>

<pallas_src>
import functools

import jax
import jax.numpy as jnp
from jax.experimental import pallas as pl
from jax.experimental.pallas import tpu as pltpu


def _round_up(x, m):
    return (x + m - 1) // m * m


def _global_attention_kernel(x_ref, bias_ref, w1b_ref, w2b_ref, p_ref, r_ref,
                             t_ref, o_ref, *, max_nodes, in_feature,
                             out_feature):
    N, F, O = max_nodes, in_feature, out_feature

    x = x_ref[...]                                         # (Gb, N*F) bf16

    # h_wide = tanh(x_wide @ blockdiag(w1^T)): one dense MXU matmul, tanh on
    # fully lane-dense (Gb, N*H) vregs.
    h = jnp.tanh(jnp.dot(x, w1b_ref[...],
                         preferred_element_type=jnp.float32))   # (Gb, N*H) f32

    # logits_wide = h_wide @ blockdiag(w2^T) -> (Gb, N*O), column n*O + o.
    logits = jnp.dot(h.astype(jnp.bfloat16), w2b_ref[...],
                     preferred_element_type=jnp.float32)

    # Additive mask bias (0 for valid node slots, -1e30 for padded ones),
    # precomputed on the host.  Everything below stays in f32.
    masked = logits + bias_ref[...]                        # (Gb, N*O)

    # Per-graph stabilizer (softmax is invariant to it); for a tanh-bounded
    # logit range this is numerically equivalent to the per-row max.
    m = jnp.max(masked, axis=-1, keepdims=True)            # (Gb, 1)
    e = jnp.exp(masked - m)                                # padded slots -> 0

    # Denominator replicated to every (n, o) lane in one tiny f32 matmul:
    #   s[g, n*O+o] = sum_m e[g, m*O+o]
    s = jnp.dot(e, p_ref[...], preferred_element_type=jnp.float32)
    a = e * pl.reciprocal(s, approx=True)                  # normalized attn

    # One-hot replication matmuls put both operands in the output lane layout
    # (lane = o*F + f within each node chunk); no per-graph matmuls, no
    # lane-broadcast loops, no reshapes.
    a_rep = jnp.dot(a, r_ref[...],
                    preferred_element_type=jnp.float32)    # (Gb, N*O*F)
    x_rep = jnp.dot(x, t_ref[...],
                    preferred_element_type=jnp.float32)    # (Gb, N*O*F)

    chunk = O * F
    acc = a_rep[:, :chunk] * x_rep[:, :chunk]
    for n in range(1, N):
        acc = acc + (a_rep[:, n * chunk:(n + 1) * chunk] *
                     x_rep[:, n * chunk:(n + 1) * chunk])

    # Lane-dense (Gb, O*F) store -> unmasked full-lane vst.
    o_ref[...] = acc.astype(o_ref.dtype)


@functools.partial(jax.jit, static_argnames=("block_graphs",))
def global_attention_pallas(x_pad, lens, w1, w2, *, block_graphs=1024):
    """x_pad: (G, max_nodes, F) zero-padded node features; lens: (G,) int32."""
    G, max_n, F = x_pad.shape
    H, F2 = w1.shape
    O, H2 = w2.shape
    assert F2 == F and H2 == H

    # Graphs per grid step: sized for the HBM roofline, multiple of 8 for
    # sublane alignment, capped so the grid keeps >= 2 steps (v7x megacore).
    half = -(-G // 2)
    Gb = max(8, _round_up(min(block_graphs, half), 8))
    G_pad = _round_up(G, Gb)

    # ---- host-side prep: bf16 big stream, masks, block-diagonal weights ----
    x_wide = x_pad.reshape(G, max_n * F).astype(jnp.bfloat16)
    if G_pad != G:
        x_wide = jnp.pad(x_wide, ((0, G_pad - G), (0, 0)))

    node = jnp.arange(max_n, dtype=jnp.int32)
    valid = node[None, :] < lens.astype(jnp.int32)[:, None]        # (G, max_n)
    bias = jnp.where(valid, 0.0, -1e30).astype(jnp.float32)
    bias = jnp.repeat(bias, O, axis=1)                             # (G, max_n*O)
    if G_pad != G:
        bias = jnp.pad(bias, ((0, G_pad - G), (0, 0)))             # tail: 0 bias

    eye_n = jnp.eye(max_n, dtype=jnp.float32)
    w1b = jnp.kron(eye_n, w1.T.astype(jnp.float32)).astype(jnp.bfloat16)
    w2b = jnp.kron(eye_n, w2.T.astype(jnp.float32)).astype(jnp.bfloat16)

    NO = max_n * O
    NOF = max_n * O * F
    # P: group-sum matrix, P[m*O+o', n*O+o] = (o' == o).
    ko = jnp.arange(NO, dtype=jnp.int32) % O
    p_mat = (ko[:, None] == ko[None, :]).astype(jnp.float32)       # (NO, NO)
    # Output lane decomposition: l = n*(O*F) + o*F + f.
    l = jnp.arange(NOF, dtype=jnp.int32)
    l_n = l // (O * F)
    l_of = l % (O * F)
    l_o = l_of // F
    l_f = l_of % F
    # R: attention replication, R[m*O+o', l] = (m == n) & (o' == o).
    k = jnp.arange(NO, dtype=jnp.int32)
    r_mat = ((k[:, None] // O == l_n[None, :]) &
             (k[:, None] % O == l_o[None, :])).astype(jnp.float32)  # (NO, NOF)
    # T: feature tiling, T[n'*F+f', l] = (n' == n) & (f' == f).
    kf = jnp.arange(max_n * F, dtype=jnp.int32)
    t_mat = ((kf[:, None] // F == l_n[None, :]) &
             (kf[:, None] % F == l_f[None, :])).astype(jnp.bfloat16)  # (N*F, NOF)

    kernel = functools.partial(_global_attention_kernel, max_nodes=max_n,
                               in_feature=F, out_feature=O)

    out = pl.pallas_call(
        kernel,
        out_shape=jax.ShapeDtypeStruct((G_pad, O * F), jnp.float32),
        grid=(G_pad // Gb,),
        in_specs=[
            pl.BlockSpec((Gb, max_n * F), lambda i: (i, 0)),        # x (bf16)
            pl.BlockSpec((Gb, NO), lambda i: (i, 0)),               # mask bias
            pl.BlockSpec((max_n * F, max_n * H), lambda i: (0, 0)),  # w1 blockdiag
            pl.BlockSpec((max_n * H, NO), lambda i: (0, 0)),         # w2 blockdiag
            pl.BlockSpec((NO, NO), lambda i: (0, 0)),                # P
            pl.BlockSpec((NO, NOF), lambda i: (0, 0)),               # R
            pl.BlockSpec((max_n * F, NOF), lambda i: (0, 0)),        # T
        ],
        out_specs=pl.BlockSpec((Gb, O * F), lambda i: (i, 0)),
        compiler_params=pltpu.CompilerParams(
            dimension_semantics=("parallel",),
            vmem_limit_bytes=32 * 1024 * 1024),
    )(x_wide, bias, w1b, w2b, p_mat, r_mat, t_mat)
    return out[:G]


def _reference(graphs, w1, w2):
    """Pure-JAX f32 reference mirroring the PyTorch forward, graph by graph."""
    outs = []
    for graph in graphs:
        h = jnp.tanh(w1 @ graph.T)                  # (H, n)
        logits = w2 @ h                             # (O, n)
        attn = jax.nn.softmax(logits, axis=-1)      # (O, n)
        outs.append((attn @ graph).reshape(-1))     # (O*F,)
    return jnp.stack(outs, axis=0)


def _xavier_normal(key, shape):
    fan_out, fan_in = shape
    std = (2.0 / (fan_in + fan_out)) ** 0.5
    return std * jax.random.normal(key, shape, dtype=jnp.float32)


if __name__ == "__main__":
    in_feature = 32
    hidden_size = 32
    out_feature = 4                # out_feature * in_feature == 128 lanes
    graph_sizes = [8, 5, 3, 8, 1, 6, 7, 2, 4, 8]   # 10 graphs, ragged
    max_nodes = 8

    key = jax.random.PRNGKey(0)
    k_w1, k_w2, k_x = jax.random.split(key, 3)

    w1 = _xavier_normal(k_w1, (hidden_size, in_feature))
    w2 = _xavier_normal(k_w2, (out_feature, hidden_size))

    # Build the ragged "batched graph" input (N, in_feature) and pad per graph.
    total_nodes = sum(graph_sizes)
    x_all = jax.random.normal(k_x, (total_nodes, in_feature), dtype=jnp.float32)

    graphs = []
    start = 0
    for n in graph_sizes:
        graphs.append(x_all[start:start + n])
        start += n

    G = len(graph_sizes)
    x_pad = jnp.zeros((G, max_nodes, in_feature), dtype=jnp.float32)
    for g, graph in enumerate(graphs):
        x_pad = x_pad.at[g, :graph.shape[0]].set(graph)
    lens = jnp.asarray(graph_sizes, dtype=jnp.int32)

    # Default block_graphs; the block-size cap keeps 2 grid steps even for
    # this tiny 10-graph demo.
    out = global_attention_pallas(x_pad, lens, w1, w2)
    out = jax.block_until_ready(out)

    ref = _reference(graphs, w1, w2)
    assert out.shape == (G, out_feature * in_feature)
    # bf16 MXU operands + approx reciprocal -> compare against the f32
    # reference with a bf16-appropriate tolerance.
    max_err = float(jnp.max(jnp.abs(out - ref)))
    assert jnp.allclose(out, ref, atol=5e-2, rtol=5e-2), (
        f"mismatch vs reference (max abs err {max_err})")

    print("KERNEL_OK")
</pallas_src>

<mosaic_0001>
module attributes {stable_mosaic.version = 11 : i64} {
  func.func @_global_attention_kernel(%arg0: i32, %arg1: memref<8x256xbf16, #tpu.memory_space<vmem>>, %arg2: memref<8x32xf32, #tpu.memory_space<vmem>>, %arg3: memref<256x256xbf16, #tpu.memory_space<vmem>>, %arg4: memref<256x32xbf16, #tpu.memory_space<vmem>>, %arg5: memref<32x32xf32, #tpu.memory_space<vmem>>, %arg6: memref<32x1024xf32, #tpu.memory_space<vmem>>, %arg7: memref<256x1024xbf16, #tpu.memory_space<vmem>>, %arg8: memref<8x128xf32, #tpu.memory_space<vmem>>) attributes {dimension_semantics = [#tpu.dimension_semantics<parallel>], iteration_bounds = array<i64: 2>, scalar_prefetch = 0 : i64, scratch_operands = 0 : i64, tpu.core_type = #tpu.core_type<tc>, window_params = [{transform_indices = @transform_0, window_bounds = array<i64: 8, 256>}, {transform_indices = @transform_1, window_bounds = array<i64: 8, 32>}, {pipeline_mode = #tpu.pipeline_mode<synchronous>, transform_indices = @transform_2, window_bounds = array<i64: 256, 256>}, {pipeline_mode = #tpu.pipeline_mode<synchronous>, transform_indices = @transform_3, window_bounds = array<i64: 256, 32>}, {pipeline_mode = #tpu.pipeline_mode<synchronous>, transform_indices = @transform_4, window_bounds = array<i64: 32, 32>}, {pipeline_mode = #tpu.pipeline_mode<synchronous>, transform_indices = @transform_5, window_bounds = array<i64: 32, 1024>}, {pipeline_mode = #tpu.pipeline_mode<synchronous>, transform_indices = @transform_6, window_bounds = array<i64: 256, 1024>}, {transform_indices = @transform_7, window_bounds = array<i64: 8, 128>}]} {
    %c0 = arith.constant 0 : index
    %c0_0 = arith.constant 0 : index
    %0 = vector.load %arg1[%c0, %c0_0] : memref<8x256xbf16, #tpu.memory_space<vmem>>, vector<8x256xbf16>
    %c0_1 = arith.constant 0 : index
    %c0_2 = arith.constant 0 : index
    %1 = vector.load %arg3[%c0_1, %c0_2] : memref<256x256xbf16, #tpu.memory_space<vmem>>, vector<256x256xbf16>
    %cst = arith.constant dense<0.000000e+00> : vector<8x256xf32>
    %2 = tpu.matmul %0, %1, %cst {dimension_numbers = #tpu.dot_dimension_numbers<[1], [0], [0], [1], [0, 0, 1, 1], [], []>} : vector<8x256xbf16>, vector<256x256xbf16>, vector<8x256xf32> -> vector<8x256xf32>
    %3 = math.tanh %2 : vector<8x256xf32>
    %4 = arith.truncf %3 : vector<8x256xf32> to vector<8x256xbf16>
    %c0_3 = arith.constant 0 : index
    %c0_4 = arith.constant 0 : index
    %5 = vector.load %arg4[%c0_3, %c0_4] : memref<256x32xbf16, #tpu.memory_space<vmem>>, vector<256x32xbf16>
    %cst_5 = arith.constant dense<0.000000e+00> : vector<8x32xf32>
    %6 = tpu.matmul %4, %5, %cst_5 {dimension_numbers = #tpu.dot_dimension_numbers<[1], [0], [0], [1], [0, 0, 1, 1], [], []>} : vector<8x256xbf16>, vector<256x32xbf16>, vector<8x32xf32> -> vector<8x32xf32>
    %c0_6 = arith.constant 0 : index
    %c0_7 = arith.constant 0 : index
    %7 = vector.load %arg2[%c0_6, %c0_7] : memref<8x32xf32, #tpu.memory_space<vmem>>, vector<8x32xf32>
    %8 = arith.addf %6, %7 : vector<8x32xf32>
    %cst_8 = arith.constant dense<0xFF800000> : vector<8xf32>
    %9 = vector.multi_reduction <maximumf>, %8, %cst_8 [1] : vector<8x32xf32> to vector<8xf32>
    %10 = vector.shape_cast %9 : vector<8xf32> to vector<8x1xf32>
    %11 = vector.broadcast %10 : vector<8x1xf32> to vector<8x32xf32>
    %12 = arith.subf %8, %11 : vector<8x32xf32>
    %13 = math.exp %12 : vector<8x32xf32>
    %c0_9 = arith.constant 0 : index
    %c0_10 = arith.constant 0 : index
    %14 = vector.load %arg5[%c0_9, %c0_10] : memref<32x32xf32, #tpu.memory_space<vmem>>, vector<32x32xf32>
    %cst_11 = arith.constant dense<0.000000e+00> : vector<8x32xf32>
    %15 = tpu.matmul %13, %14, %cst_11 {dimension_numbers = #tpu.dot_dimension_numbers<[1], [0], [0], [1], [0, 0, 1, 1], [], []>} : vector<8x32xf32>, vector<32x32xf32>, vector<8x32xf32> -> vector<8x32xf32>
    %16 = tpu.reciprocal %15 {approx = true} : vector<8x32xf32> -> vector<8x32xf32>
    %17 = arith.mulf %13, %16 : vector<8x32xf32>
    %c0_12 = arith.constant 0 : index
    %c0_13 = arith.constant 0 : index
    %18 = vector.load %arg6[%c0_12, %c0_13] : memref<32x1024xf32, #tpu.memory_space<vmem>>, vector<32x1024xf32>
    %cst_14 = arith.constant dense<0.000000e+00> : vector<8x1024xf32>
    %19 = tpu.matmul %17, %18, %cst_14 {dimension_numbers = #tpu.dot_dimension_numbers<[1], [0], [0], [1], [0, 0, 1, 1], [], []>} : vector<8x32xf32>, vector<32x1024xf32>, vector<8x1024xf32> -> vector<8x1024xf32>
    %c0_15 = arith.constant 0 : index
    %c0_16 = arith.constant 0 : index
    %20 = vector.load %arg7[%c0_15, %c0_16] : memref<256x1024xbf16, #tpu.memory_space<vmem>>, vector<256x1024xbf16>
    %cst_17 = arith.constant dense<0.000000e+00> : vector<8x1024xf32>
    %21 = tpu.matmul %0, %20, %cst_17 {dimension_numbers = #tpu.dot_dimension_numbers<[1], [0], [0], [1], [0, 0, 1, 1], [], []>} : vector<8x256xbf16>, vector<256x1024xbf16>, vector<8x1024xf32> -> vector<8x1024xf32>
    %22 = vector.extract_strided_slice %19 {offsets = [0, 0], sizes = [8, 128], strides = [1, 1]} : vector<8x1024xf32> to vector<8x128xf32>
    %23 = vector.extract_strided_slice %21 {offsets = [0, 0], sizes = [8, 128], strides = [1, 1]} : vector<8x1024xf32> to vector<8x128xf32>
    %24 = arith.mulf %22, %23 : vector<8x128xf32>
    %25 = vector.extract_strided_slice %19 {offsets = [0, 128], sizes = [8, 128], strides = [1, 1]} : vector<8x1024xf32> to vector<8x128xf32>
    %26 = vector.extract_strided_slice %21 {offsets = [0, 128], sizes = [8, 128], strides = [1, 1]} : vector<8x1024xf32> to vector<8x128xf32>
    %27 = arith.mulf %25, %26 : vector<8x128xf32>
    %28 = arith.addf %24, %27 : vector<8x128xf32>
    %29 = vector.extract_strided_slice %19 {offsets = [0, 256], sizes = [8, 128], strides = [1, 1]} : vector<8x1024xf32> to vector<8x128xf32>
    %30 = vector.extract_strided_slice %21 {offsets = [0, 256], sizes = [8, 128], strides = [1, 1]} : vector<8x1024xf32> to vector<8x128xf32>
    %31 = arith.mulf %29, %30 : vector<8x128xf32>
    %32 = arith.addf %28, %31 : vector<8x128xf32>
    %33 = vector.extract_strided_slice %19 {offsets = [0, 384], sizes = [8, 128], strides = [1, 1]} : vector<8x1024xf32> to vector<8x128xf32>
    %34 = vector.extract_strided_slice %21 {offsets = [0, 384], sizes = [8, 128], strides = [1, 1]} : vector<8x1024xf32> to vector<8x128xf32>
    %35 = arith.mulf %33, %34 : vector<8x128xf32>
    %36 = arith.addf %32, %35 : vector<8x128xf32>
    %37 = vector.extract_strided_slice %19 {offsets = [0, 512], sizes = [8, 128], strides = [1, 1]} : vector<8x1024xf32> to vector<8x128xf32>
    %38 = vector.extract_strided_slice %21 {offsets = [0, 512], sizes = [8, 128], strides = [1, 1]} : vector<8x1024xf32> to vector<8x128xf32>
    %39 = arith.mulf %37, %38 : vector<8x128xf32>
    %40 = arith.addf %36, %39 : vector<8x128xf32>
    %41 = vector.extract_strided_slice %19 {offsets = [0, 640], sizes = [8, 128], strides = [1, 1]} : vector<8x1024xf32> to vector<8x128xf32>
    %42 = vector.extract_strided_slice %21 {offsets = [0, 640], sizes = [8, 128], strides = [1, 1]} : vector<8x1024xf32> to vector<8x128xf32>
    %43 = arith.mulf %41, %42 : vector<8x128xf32>
    %44 = arith.addf %40, %43 : vector<8x128xf32>
    %45 = vector.extract_strided_slice %19 {offsets = [0, 768], sizes = [8, 128], strides = [1, 1]} : vector<8x1024xf32> to vector<8x128xf32>
    %46 = vector.extract_strided_slice %21 {offsets = [0, 768], sizes = [8, 128], strides = [1, 1]} : vector<8x1024xf32> to vector<8x128xf32>
    %47 = arith.mulf %45, %46 : vector<8x128xf32>
    %48 = arith.addf %44, %47 : vector<8x128xf32>
    %49 = vector.extract_strided_slice %19 {offsets = [0, 896], sizes = [8, 128], strides = [1, 1]} : vector<8x1024xf32> to vector<8x128xf32>
    %50 = vector.extract_strided_slice %21 {offsets = [0, 896], sizes = [8, 128], strides = [1, 1]} : vector<8x1024xf32> to vector<8x128xf32>
    %51 = arith.mulf %49, %50 : vector<8x128xf32>
    %52 = arith.addf %48, %51 : vector<8x128xf32>
    %c0_18 = arith.constant 0 : index
    %c0_19 = arith.constant 0 : index
    %53 = vector.load %arg8[%c0_18, %c0_19] : memref<8x128xf32, #tpu.memory_space<vmem>>, vector<8x128xf32>
    tpu.vector_store %arg8[%c0_18, %c0_19], %52 {strides = array<i32>} : memref<8x128xf32, #tpu.memory_space<vmem>>, vector<8x128xf32>,
    return
  }
  func.func @transform_0(%arg0: i32) -> (i32, i32) {
    %c0_i32 = arith.constant 0 : i32
    %c0_i32_0 = arith.constant 0 : i32
    return %arg0, %c0_i32 : i32, i32
  }
  func.func @transform_1(%arg0: i32) -> (i32, i32) {
    %c0_i32 = arith.constant 0 : i32
    %c0_i32_0 = arith.constant 0 : i32
    return %arg0, %c0_i32 : i32, i32
  }
  func.func @transform_2(%arg0: i32) -> (i32, i32) {
    %c0_i32 = arith.constant 0 : i32
    %c0_i32_0 = arith.constant 0 : i32
    %c0_i32_1 = arith.constant 0 : i32
    return %c0_i32, %c0_i32_0 : i32, i32
  }
  func.func @transform_3(%arg0: i32) -> (i32, i32) {
    %c0_i32 = arith.constant 0 : i32
    %c0_i32_0 = arith.constant 0 : i32
    %c0_i32_1 = arith.constant 0 : i32
    return %c0_i32, %c0_i32_0 : i32, i32
  }
  func.func @transform_4(%arg0: i32) -> (i32, i32) {
    %c0_i32 = arith.constant 0 : i32
    %c0_i32_0 = arith.constant 0 : i32
    %c0_i32_1 = arith.constant 0 : i32
    return %c0_i32, %c0_i32_0 : i32, i32
  }
  func.func @transform_5(%arg0: i32) -> (i32, i32) {
    %c0_i32 = arith.constant 0 : i32
    %c0_i32_0 = arith.constant 0 : i32
    %c0_i32_1 = arith.constant 0 : i32
    return %c0_i32, %c0_i32_0 : i32, i32
  }
  func.func @transform_6(%arg0: i32) -> (i32, i32) {
    %c0_i32 = arith.constant 0 : i32
    %c0_i32_0 = arith.constant 0 : i32
    %c0_i32_1 = arith.constant 0 : i32
    return %c0_i32, %c0_i32_0 : i32, i32
  }
  func.func @transform_7(%arg0: i32) -> (i32, i32) {
    %c0_i32 = arith.constant 0 : i32
    %c0_i32_0 = arith.constant 0 : i32
    return %arg0, %c0_i32 : i32, i32
  }
}

</mosaic_0001>

<llo_original>
// kernel: global_attention_pallas.1
$region0: #{global_attention_pallas.1}
  #allocation0 [shape = 'u32[]', space=smem, size = 0x4, offset = 0x4, fixed_abs, tag = 'smem constant byte address 0x4 - core index']
  #allocation1 [shape = 'u32[144,128]{1,0:T(1,128)}', space=vmem, size = 0x12000, scoped, tag = 'internal scratch']
  %s0 = inlined_call_operand.vmem [shape: bf16[16,256], index: 0, kind: input, shape index: {}]
  %s1 = inlined_call_operand.vmem [shape: f32[16,32], index: 1, kind: input, shape index: {}]
  %s2 = inlined_call_operand.vmem [shape: bf16[256,256], index: 2, kind: input, shape index: {}]
  %s3 = inlined_call_operand.vmem [shape: bf16[256,32], index: 3, kind: input, shape index: {}]
  %s4 = inlined_call_operand.vmem [shape: f32[32,32], index: 4, kind: input, shape index: {}]
  %s5 = inlined_call_operand.vmem [shape: f32[32,1024], index: 5, kind: input, shape index: {}]
  %s6 = inlined_call_operand.vmem [shape: bf16[256,1024], index: 6, kind: input, shape index: {}]
  %s7 = inlined_call_operand.hbm [shape: f32[16,128], index: 7, kind: output, shape index: {}]
  %s8 = sld [smem:[#allocation0]]
  $region61: #{global_attention_pallas.1} parent=0
    _
  %s10 = ssub.s32 1, %s8
  %s11 = scalar_select 0, %s10, %s8
  $region1: #{global_attention_pallas.1} parent=0
    #allocation2 [shape = 'u8[8192]{0}', space=vmem, size = 0x2000, scoped, tag = 'output window, operand 0']
    #allocation3 [shape = 's32[2]{0}', space=sflag, size = 0x8, scoped, tag = 'scoped memory for global_attention_pallas.1']
    %12 = vsyncpa [#allocation3], 0
    %s13 = scalar_lea.sflag [#allocation3], 1
    %14 = vsyncpa %s13, 0
    loop: start=0, step=1, limit=4
    $region2: #{global_attention_pallas.1} parent=1 // loop_pre_header
      _
    $region3: #{global_attention_pallas.1} parent=1 // loop_header
      %s16 = sphi 0, %s20
      %p17 = scmp.ge.s32.totalorder %s16, 4
      %s26 = sphi 0, %s28
      %s29 = sphi 0, %s26
      %s30 = sphi 0, %s29
      %s46 = sphi 0, %s30
      %s52 = sphi 0, %s54
      %s55 = sphi 0, %s52
      %s56 = sphi 0, %s55
      %s72 = sphi 0, %s56
      %s76 = sphi 0, %s76
      %s78 = sphi 0, %s76
      %s79 = sphi 0, %s78
      %s93 = sphi 0, %s79
      %s97 = sphi 0, %s97
      %s99 = sphi 0, %s97
      %s100 = sphi 0, %s99
      %s114 = sphi 0, %s100
      %s118 = sphi 0, %s118
      %s120 = sphi 0, %s118
      %s121 = sphi 0, %s120
      %s135 = sphi 0, %s121
      %s139 = sphi 0, %s139
      %s141 = sphi 0, %s139
      %s142 = sphi 0, %s141
      %s156 = sphi 0, %s142
      %s160 = sphi 0, %s160
      %s162 = sphi 0, %s160
      %s163 = sphi 0, %s162
      %s177 = sphi 0, %s163
      %s183 = sphi 0, %s185
      %s186 = sphi 0, %s183
      %s187 = sphi 0, %s186
      %s203 = sphi 0, %s187
    $region4: #{global_attention_pallas.1} parent=1 // loop_header_branch
      %19 = sbr.rel (%p17) target = $region8
    $region5: #{global_attention_pallas.1} parent=1 // loop_body
      %s21 = ssub.s32 %s16, 1
      %s22 = ssub.s32 %s16, 2
      %s23 = sadd.s32 %s16, 1
      %s24 = ssub.s32 %s16, %s23
      %p25 = scmp.eq.s32.totalorder %s24, 0
      %s27 = sadd.s32 %s26, 1
      %s28 = scalar_select %p25, %s26, %s27
      %p31 = pneg %p25
      %p32 = scmp.eq.s32.totalorder %s16, 1
      %p33 = por %p31, %p32
      %p34 = scmp.ne.s32.totalorder %s26, %s29
      %p35 = scmp.eq.s32.totalorder %s16, 0
      %p36 = por %p34, %p35
      %p37 = scmp.ne.s32.totalorder %s26, %s29
      %p38 = scmp.eq.s32.totalorder %s21, 1
      %p39 = por %p37, %p38
      %p40 = scmp.ne.s32.totalorder %s29, %s30
      %p41 = scmp.eq.s32.totalorder %s21, 0
      %p42 = por %p40, %p41
      %p43 = scmp.ne.s32.totalorder %s29, %s30
      %p44 = scmp.eq.s32.totalorder %s22, 1
      %p45 = por %p43, %p44
      %p47 = scmp.ne.s32.totalorder %s30, %s46
      %p48 = scmp.eq.s32.totalorder %s22, 0
      %p49 = por %p47, %p48
      %s50 = ssub.s32 %s16, %s23
      %p51 = scmp.eq.s32.totalorder %s50, 0
      %s53 = sadd.s32 %s52, 1
      %s54 = scalar_select %p51, %s52, %s53
      %p57 = pneg %p51
      %p58 = scmp.eq.s32.totalorder %s16, 1
      %p59 = por %p57, %p58
      %p60 = scmp.ne.s32.totalorder %s52, %s55
      %p61 = scmp.eq.s32.totalorder %s16, 0
      %p62 = por %p60, %p61
      %p63 = scmp.ne.s32.totalorder %s52, %s55
      %p64 = scmp.eq.s32.totalorder %s21, 1
      %p65 = por %p63, %p64
      %p66 = scmp.ne.s32.totalorder %s55, %s56
      %p67 = scmp.eq.s32.totalorder %s21, 0
      %p68 = por %p66, %p67
      %p69 = scmp.ne.s32.totalorder %s55, %s56
      %p70 = scmp.eq.s32.totalorder %s22, 1
      %p71 = por %p69, %p70
      %p73 = scmp.ne.s32.totalorder %s56, %s72
      %p74 = scmp.eq.s32.totalorder %s22, 0
      %p75 = por %p73, %p74
      %s77 = sadd.s32 %s76, 1
      %p80 = scmp.eq.s32.totalorder %s16, 1
      %p81 = scmp.ne.s32.totalorder %s76, %s78
      %p82 = scmp.eq.s32.totalorder %s16, 0
      %p83 = por %p81, %p82
      %p84 = scmp.ne.s32.totalorder %s76, %s78
      %p85 = scmp.eq.s32.totalorder %s21, 1
      %p86 = por %p84, %p85
      %p87 = scmp.ne.s32.totalorder %s78, %s79
      %p88 = scmp.eq.s32.totalorder %s21, 0
      %p89 = por %p87, %p88
      %p90 = scmp.ne.s32.totalorder %s78, %s79
      %p91 = scmp.eq.s32.totalorder %s22, 1
      %p92 = por %p90, %p91
      %p94 = scmp.ne.s32.totalorder %s79, %s93
      %p95 = scmp.eq.s32.totalorder %s22, 0
      %p96 = por %p94, %p95
      %s98 = sadd.s32 %s97, 1
      %p101 = scmp.eq.s32.totalorder %s16, 1
      %p102 = scmp.ne.s32.totalorder %s97, %s99
      %p103 = scmp.eq.s32.totalorder %s16, 0
      %p104 = por %p102, %p103
      %p105 = scmp.ne.s32.totalorder %s97, %s99
      %p106 = scmp.eq.s32.totalorder %s21, 1
      %p107 = por %p105, %p106
      %p108 = scmp.ne.s32.totalorder %s99, %s100
      %p109 = scmp.eq.s32.totalorder %s21, 0
      %p110 = por %p108, %p109
      %p111 = scmp.ne.s32.totalorder %s99, %s100
      %p112 = scmp.eq.s32.totalorder %s22, 1
      %p113 = por %p111, %p112
      %p115 = scmp.ne.s32.totalorder %s100, %s114
      %p116 = scmp.eq.s32.totalorder %s22, 0
      %p117 = por %p115, %p116
      %s119 = sadd.s32 %s118, 1
      %p122 = scmp.eq.s32.totalorder %s16, 1
      %p123 = scmp.ne.s32.totalorder %s118, %s120
      %p124 = scmp.eq.s32.totalorder %s16, 0
      %p125 = por %p123, %p124
      %p126 = scmp.ne.s32.totalorder %s118, %s120
      %p127 = scmp.eq.s32.totalorder %s21, 1
      %p128 = por %p126, %p127
      %p129 = scmp.ne.s32.totalorder %s120, %s121
      %p130 = scmp.eq.s32.totalorder %s21, 0
      %p131 = por %p129, %p130
      %p132 = scmp.ne.s32.totalorder %s120, %s121
      %p133 = scmp.eq.s32.totalorder %s22, 1
      %p134 = por %p132, %p133
      %p136 = scmp.ne.s32.totalorder %s121, %s135
      %p137 = scmp.eq.s32.totalorder %s22, 0
      %p138 = por %p136, %p137
      %s140 = sadd.s32 %s139, 1
      %p143 = scmp.eq.s32.totalorder %s16, 1
      %p144 = scmp.ne.s32.totalorder %s139, %s141
      %p145 = scmp.eq.s32.totalorder %s16, 0
      %p146 = por %p144, %p145
      %p147 = scmp.ne.s32.totalorder %s139, %s141
      %p148 = scmp.eq.s32.totalorder %s21, 1
      %p149 = por %p147, %p148
      %p150 = scmp.ne.s32.totalorder %s141, %s142
      %p151 = scmp.eq.s32.totalorder %s21, 0
      %p152 = por %p150, %p151
      %p153 = scmp.ne.s32.totalorder %s141, %s142
      %p154 = scmp.eq.s32.totalorder %s22, 1
      %p155 = por %p153, %p154
      %p157 = scmp.ne.s32.totalorder %s142, %s156
      %p158 = scmp.eq.s32.totalorder %s22, 0
      %p159 = por %p157, %p158
      %s161 = sadd.s32 %s160, 1
      %p164 = scmp.eq.s32.totalorder %s16, 1
      %p165 = scmp.ne.s32.totalorder %s160, %s162
      %p166 = scmp.eq.s32.totalorder %s16, 0
      %p167 = por %p165, %p166
      %p168 = scmp.ne.s32.totalorder %s160, %s162
      %p169 = scmp.eq.s32.totalorder %s21, 1
      %p170 = por %p168, %p169
      %p171 = scmp.ne.s32.totalorder %s162, %s163
      %p172 = scmp.eq.s32.totalorder %s21, 0
      %p173 = por %p171, %p172
      %p174 = scmp.ne.s32.totalorder %s162, %s163
      %p175 = scmp.eq.s32.totalorder %s22, 1
      %p176 = por %p174, %p175
      %p178 = scmp.ne.s32.totalorder %s163, %s177
      %p179 = scmp.eq.s32.totalorder %s22, 0
      %p180 = por %p178, %p179
      %s181 = ssub.s32 %s16, %s23
      %p182 = scmp.eq.s32.totalorder %s181, 0
      %s184 = sadd.s32 %s183, 1
      %s185 = scalar_select %p182, %s183, %s184
      %p188 = pneg %p182
      %p189 = scmp.eq.s32.totalorder %s16, 1
      %p190 = por %p188, %p189
      %p191 = scmp.ne.s32.totalorder %s183, %s186
      %p192 = scmp.eq.s32.totalorder %s16, 0
      %p193 = por %p191, %p192
      %p194 = scmp.ne.s32.totalorder %s183, %s186
      %p195 = scmp.eq.s32.totalorder %s21, 1
      %p196 = por %p194, %p195
      %p197 = scmp.ne.s32.totalorder %s186, %s187
      %p198 = scmp.eq.s32.totalorder %s21, 0
      %p199 = por %p197, %p198
      %p200 = scmp.ne.s32.totalorder %s186, %s187
      %p201 = scmp.eq.s32.totalorder %s22, 1
      %p202 = por %p200, %p201
      %p204 = scmp.ne.s32.totalorder %s187, %s203
      %p205 = scmp.eq.s32.totalorder %s22, 0
      %p206 = por %p204, %p205
      %p207 = scmp.le.s32.totalorder 1, %s16
      %p208 = scmp.lt.s32.totalorder %s16, 3
      %p209 = pnand %p207, %p208
      %p210 = pneg %p209
      // Predicated region
      $region9: #{global_attention_pallas.1} parent=5 // pred_check
        _
      $region10: #{global_attention_pallas.1} parent=5 // pred_check_branch
        %212 = sbr.rel (%p209) target = $region12
      $region11: #{global_attention_pallas.1} parent=5 // pred_region
        %s213 = ssub.s32 %s16, 1
        // Predicated region
        $region13: #{global_attention_pallas.1} parent=11 // pred_check
          %p214 = pneg %p89
        $region14: #{global_attention_pallas.1} parent=11 // pred_check_branch
          %216 = sbr.rel (%p214) target = $region16
        $region15: #{global_attention_pallas.1} parent=11 // pred_region
          _
        $region16: #{global_attention_pallas.1} parent=11 // pred_fallthru
          _
        // Predicated region
        $region17: #{global_attention_pallas.1} parent=11 // pred_check
          %p217 = pneg %p110
        $region18: #{global_attention_pallas.1} parent=11 // pred_check_branch
          %219 = sbr.rel (%p217) target = $region20
        $region19: #{global_attention_pallas.1} parent=11 // pred_region
          _
        $region20: #{global_attention_pallas.1} parent=11 // pred_fallthru
          _
        // Predicated region
        $region21: #{global_attention_pallas.1} parent=11 // pred_check
          %p220 = pneg %p131
        $region22: #{global_attention_pallas.1} parent=11 // pred_check_branch
          %222 = sbr.rel (%p220) target = $region24
        $region23: #{global_attention_pallas.1} parent=11 // pred_region
          _
        $region24: #{global_attention_pallas.1} parent=11 // pred_fallthru
          _
        // Predicated region
        $region25: #{global_attention_pallas.1} parent=11 // pred_check
          %p223 = pneg %p152
        $region26: #{global_attention_pallas.1} parent=11 // pred_check_branch
          %225 = sbr.rel (%p223) target = $region28
        $region27: #{global_attention_pallas.1} parent=11 // pred_region
          _
        $region28: #{global_attention_pallas.1} parent=11 // pred_fallthru
          _
        // Predicated region
        $region29: #{global_attention_pallas.1} parent=11 // pred_check
          %p226 = pneg %p173
        $region30: #{global_attention_pallas.1} parent=11 // pred_check_branch
          %228 = sbr.rel (%p226) target = $region32
        $region31: #{global_attention_pallas.1} parent=11 // pred_region
          _
        $region32: #{global_attention_pallas.1} parent=11 // pred_fallthru
          _
      $region12: #{global_attention_pallas.1} parent=5 // pred_fallthru
        _
      %p229 = scmp.lt.s32.totalorder %s16, 2
      // Predicated region
      $region33: #{global_attention_pallas.1} parent=5 // pred_check
        %p230 = pneg %p229
      $region34: #{global_attention_pallas.1} parent=5 // pred_check_branch
        %232 = sbr.rel (%p230) target = $region36
      $region35: #{global_attention_pallas.1} parent=5 // pred_region
        // Predicated region
        $region37: #{global_attention_pallas.1} parent=35 // pred_check
          %p233 = pneg %p36
        $region38: #{global_attention_pallas.1} parent=35 // pred_check_branch
          %235 = sbr.rel (%p233) target = $region40
        $region39: #{global_attention_pallas.1} parent=35 // pred_region
          %p236 = scmp.lt.s32.totalorder %s16, 1
          %s237 = scalar_select %p236, %s16, 1
          %s238 = smul.addr %s237, 2
          %s239 = smul.addr %s238, 4
          %s240 = scalar_lea.vmem %s0, %s239
        $region40: #{global_attention_pallas.1} parent=35 // pred_fallthru
          _
        // Predicated region
        $region41: #{global_attention_pallas.1} parent=35 // pred_check
          %p241 = pneg %p62
        $region42: #{global_attention_pallas.1} parent=35 // pred_check_branch
          %243 = sbr.rel (%p241) target = $region44
        $region43: #{global_attention_pallas.1} parent=35 // pred_region
          %p244 = scmp.lt.s32.totalorder %s16, 1
          %s245 = scalar_select %p244, %s16, 1
          %s246 = smul.addr %s245, 8
          %s247 = scalar_lea.vmem %s1, %s246
        $region44: #{global_attention_pallas.1} parent=35 // pred_fallthru
          _
      $region36: #{global_attention_pallas.1} parent=5 // pred_fallthru
        _
      %p248 = scmp.le.s32.totalorder 1, %s16
      %p249 = scmp.lt.s32.totalorder %s16, 3
      %p250 = pnand %p248, %p249
      %p251 = pneg %p250
      // Predicated region
      $region45: #{global_attention_pallas.1} parent=5 // pred_check
        _
      $region46: #{global_attention_pallas.1} parent=5 // pred_check_branch
        %253 = sbr.rel (%p250) target = $region48
      $region47: #{global_attention_pallas.1} parent=5 // pred_region
        %s254 = ssub.s32 %s16, 1
        %p255 = scmp.lt.s32.totalorder %s21, 1
        %s256 = scalar_select %p255, %s21, 1
        %s257 = smul.addr %s256, 2
        %s258 = smul.addr %s257, 4
        %s259 = scalar_lea.vmem %s0, %s258
        %p260 = pneg %p42
        %p261 = pneg %p39
        %p262 = scmp.lt.s32.totalorder %s21, 1
        %s263 = scalar_select %p262, %s21, 1
        %s264 = smul.addr %s263, 8
        %s265 = scalar_lea.vmem %s1, %s264
        %p266 = pneg %p68
        %p267 = pneg %p65
        %p268 = pneg %p89
        %p269 = pneg %p86
        %p270 = pneg %p110
        %p271 = pneg %p107
        %p272 = pneg %p131
        %p273 = pneg %p128
        %p274 = pneg %p152
        %p275 = pneg %p149
        %p276 = pneg %p173
        %p277 = pneg %p170
        %p278 = pneg %p199
        %p279 = pneg %p196
        %s280 = sand.u32 %s186, 1
        %s281 = scalar_lea.sflag [#allocation3], %s280
        %s282 = sand.u32 %s186, 1
        %s283 = smul.addr %s282, 8
        %s284 = scalar_lea.vmem [#allocation2], %s283
        %p285 = scmp.lt.s32.totalorder %s21, 1
        %s286 = scalar_select %p285, %s21, 1
        %s287 = smul.addr %s286, 2
        %s288 = smul.addr %s287, 4
        %s289 = scalar_lea.vmem %s0, %s288
        %p290 = scmp.lt.s32.totalorder %s21, 1
        %s291 = scalar_select %p290, %s21, 1
        %s292 = smul.addr %s291, 8
        %s293 = scalar_lea.vmem %s1, %s292
        %v295 = vld [vmem:[%s289] sm:$0xff]
        %v296 = vld [vmem:[%s2] sm:$0xff]
        %v297 = vld [vmem:[%s2 + $0x8] sm:$0xff]
        %v298 = vld [vmem:[%s2 + $0x10] sm:$0xff]
        %v299 = vld [vmem:[%s2 + $0x18] sm:$0xff]
        %v300 = vld [vmem:[%s2 + $0x20] sm:$0xff]
        %v301 = vld [vmem:[%s2 + $0x28] sm:$0xff]
        %v302 = vld [vmem:[%s2 + $0x30] sm:$0xff]
        %v303 = vld [vmem:[%s2 + $0x38] sm:$0xff]
        %v304 = vld [vmem:[%s2 + $0x40] sm:$0xff]
        %v305 = vld [vmem:[%s2 + $0x48] sm:$0xff]
        %v306 = vld [vmem:[%s2 + $0x50] sm:$0xff]
        %v307 = vld [vmem:[%s2 + $0x58] sm:$0xff]
        %v308 = vld [vmem:[%s2 + $0x60] sm:$0xff]
        %v309 = vld [vmem:[%s2 + $0x68] sm:$0xff]
        %v310 = vld [vmem:[%s2 + $0x70] sm:$0xff]
        %v311 = vld [vmem:[%s2 + $0x78] sm:$0xff]
        %v312 = vld [vmem:[%s2 + $0x80] sm:$0xff]
        %v313 = vld [vmem:[%s2 + $0x88] sm:$0xff]
        %v314 = vld [vmem:[%s2 + $0x90] sm:$0xff]
        %v315 = vld [vmem:[%s2 + $0x98] sm:$0xff]
        %v316 = vld [vmem:[%s2 + $0xa0] sm:$0xff]
        %v317 = vld [vmem:[%s2 + $0xa8] sm:$0xff]
        %v318 = vld [vmem:[%s2 + $0xb0] sm:$0xff]
        %v319 = vld [vmem:[%s2 + $0xb8] sm:$0xff]
        %v320 = vld [vmem:[%s2 + $0xc0] sm:$0xff]
        %v321 = vld [vmem:[%s2 + $0xc8] sm:$0xff]
        %v322 = vld [vmem:[%s2 + $0xd0] sm:$0xff]
        %v323 = vld [vmem:[%s2 + $0xd8] sm:$0xff]
        %v324 = vld [vmem:[%s2 + $0xe0] sm:$0xff]
        %v325 = vld [vmem:[%s2 + $0xe8] sm:$0xff]
        %v326 = vld [vmem:[%s2 + $0xf0] sm:$0xff]
        %v327 = vld [vmem:[%s2 + $0xf8] sm:$0xff]
        %v329 = vunpack.c.l.b16 %v295
        %v330 = vunpack.c.h.b16 %v295
        %v331 = vpack.c.b16 %v329, %v329
        %v332 = vpack.c.b16 %v330, %v330
        %v367 = vunpack.c.l.b16 %v296
        %v368 = vunpack.c.h.b16 %v296
        %v369 = vunpack.c.l.b16 %v297
        %v370 = vunpack.c.h.b16 %v297
        %v371 = vunpack.c.l.b16 %v298
        %v372 = vunpack.c.h.b16 %v298
        %v373 = vunpack.c.l.b16 %v299
        %v374 = vunpack.c.h.b16 %v299
        %v375 = vunpack.c.l.b16 %v300
        %v376 = vunpack.c.h.b16 %v300
        %v377 = vunpack.c.l.b16 %v301
        %v378 = vunpack.c.h.b16 %v301
        %v379 = vunpack.c.l.b16 %v302
        %v380 = vunpack.c.h.b16 %v302
        %v381 = vunpack.c.l.b16 %v303
        %v382 = vunpack.c.h.b16 %v303
        %v383 = vunpack.c.l.b16 %v304
        %v384 = vunpack.c.h.b16 %v304
        %v385 = vunpack.c.l.b16 %v305
        %v386 = vunpack.c.h.b16 %v305
        %v387 = vunpack.c.l.b16 %v306
        %v388 = vunpack.c.h.b16 %v306
        %v389 = vunpack.c.l.b16 %v307
        %v390 = vunpack.c.h.b16 %v307
        %v391 = vunpack.c.l.b16 %v308
        %v392 = vunpack.c.h.b16 %v308
        %v393 = vunpack.c.l.b16 %v309
        %v394 = vunpack.c.h.b16 %v309
        %v395 = vunpack.c.l.b16 %v310
        %v396 = vunpack.c.h.b16 %v310
        %v397 = vunpack.c.l.b16 %v311
        %v398 = vunpack.c.h.b16 %v311
        %v399 = vunpack.c.l.b16 %v312
        %v400 = vunpack.c.h.b16 %v312
        %v401 = vunpack.c.l.b16 %v313
        %v402 = vunpack.c.h.b16 %v313
        %v403 = vunpack.c.l.b16 %v314
        %v404 = vunpack.c.h.b16 %v314
        %v405 = vunpack.c.l.b16 %v315
        %v406 = vunpack.c.h.b16 %v315
        %v407 = vunpack.c.l.b16 %v316
        %v408 = vunpack.c.h.b16 %v316
        %v409 = vunpack.c.l.b16 %v317
        %v410 = vunpack.c.h.b16 %v317
        %v411 = vunpack.c.l.b16 %v318
        %v412 = vunpack.c.h.b16 %v318
        %v413 = vunpack.c.l.b16 %v319
        %v414 = vunpack.c.h.b16 %v319
        %v415 = vunpack.c.l.b16 %v320
        %v416 = vunpack.c.h.b16 %v320
        %v417 = vunpack.c.l.b16 %v321
        %v418 = vunpack.c.h.b16 %v321
        %v419 = vunpack.c.l.b16 %v322
        %v420 = vunpack.c.h.b16 %v322
        %v421 = vunpack.c.l.b16 %v323
        %v422 = vunpack.c.h.b16 %v323
        %v423 = vunpack.c.l.b16 %v324
        %v424 = vunpack.c.h.b16 %v324
        %v425 = vunpack.c.l.b16 %v325
        %v426 = vunpack.c.h.b16 %v325
        %v427 = vunpack.c.l.b16 %v326
        %v428 = vunpack.c.h.b16 %v326
        %v429 = vunpack.c.l.b16 %v327
        %v430 = vunpack.c.h.b16 %v327
        %v431 = vpack.c.b16 %v369, %v367
        %v432 = vpack.c.b16 %v370, %v368
        %v433 = vpack.c.b16 %v373, %v371
        %v434 = vpack.c.b16 %v374, %v372
        %v435 = vpack.c.b16 %v377, %v375
        %v436 = vpack.c.b16 %v378, %v376
        %v437 = vpack.c.b16 %v381, %v379
        %v438 = vpack.c.b16 %v382, %v380
        %v439 = vpack.c.b16 %v385, %v383
        %v440 = vpack.c.b16 %v386, %v384
        %v441 = vpack.c.b16 %v389, %v387
        %v442 = vpack.c.b16 %v390, %v388
        %v443 = vpack.c.b16 %v393, %v391
        %v444 = vpack.c.b16 %v394, %v392
        %v445 = vpack.c.b16 %v397, %v395
        %v446 = vpack.c.b16 %v398, %v396
        %v447 = vpack.c.b16 %v401, %v399
        %v448 = vpack.c.b16 %v402, %v400
        %v449 = vpack.c.b16 %v405, %v403
        %v450 = vpack.c.b16 %v406, %v404
        %v451 = vpack.c.b16 %v409, %v407
        %v452 = vpack.c.b16 %v410, %v408
        %v453 = vpack.c.b16 %v413, %v411
        %v454 = vpack.c.b16 %v414, %v412
        %v455 = vpack.c.b16 %v417, %v415
        %v456 = vpack.c.b16 %v418, %v416
        %v457 = vpack.c.b16 %v421, %v419
        %v458 = vpack.c.b16 %v422, %v420
        %v459 = vpack.c.b16 %v425, %v423
        %v460 = vpack.c.b16 %v426, %v424
        %v461 = vpack.c.b16 %v429, %v427
        %v462 = vpack.c.b16 %v430, %v428
        %495 = vmatprep.subr.bf16.mxu0 %v432
        %496 = vmatpush1.bf16.msra.mxu0 %v431
        %497 = vmatprep.subr.bf16.mxu0 %v434
        %498 = vmatpush1.bf16.msra.mxu0 %v433
        %499 = vmatprep.subr.bf16.mxu0 %v436
        %500 = vmatpush1.bf16.msra.mxu0 %v435
        %501 = vmatprep.subr.bf16.mxu0 %v438
        %502 = vmatpush1.bf16.msra.mxu0 %v437
        %503 = vmatprep.subr.bf16.mxu0 %v440
        %504 = vmatpush1.bf16.msra.mxu0 %v439
        %505 = vmatprep.subr.bf16.mxu0 %v442
        %506 = vmatpush1.bf16.msra.mxu0 %v441
        %507 = vmatprep.subr.bf16.mxu0 %v444
        %508 = vmatpush1.bf16.msra.mxu0 %v443
        %509 = vmatprep.subr.bf16.mxu0 %v446
        %510 = vmatpush1.bf16.msra.mxu0 %v445
        %511 = vmatprep.subr.bf16.mxu0 %v448
        %512 = vmatpush1.bf16.msra.mxu0 %v447
        %513 = vmatprep.subr.bf16.mxu0 %v450
        %514 = vmatpush1.bf16.msra.mxu0 %v449
        %515 = vmatprep.subr.bf16.mxu0 %v452
        %516 = vmatpush1.bf16.msra.mxu0 %v451
        %517 = vmatprep.subr.bf16.mxu0 %v454
        %518 = vmatpush1.bf16.msra.mxu0 %v453
        %519 = vmatprep.subr.bf16.mxu0 %v456
        %520 = vmatpush1.bf16.msra.mxu0 %v455
        %521 = vmatprep.subr.bf16.mxu0 %v458
        %522 = vmatpush1.bf16.msra.mxu0 %v457
        %523 = vmatprep.subr.bf16.mxu0 %v460
        %524 = vmatpush1.bf16.msra.mxu0 %v459
        %525 = vmatprep.subr.bf16.mxu0 %v462
        %526 = vmatpush1.bf16.msra.mxu0 %v461
        %527 = vmatprep.mubr.bf16.mxu0 %v332
        %528 = vmatmul.mubr.bf16.gmra.mrb[0].mxu0 %v331
        %v529 = vpop.f32.mrb[0].mxu0
        %v530 = vadd.f32 0.0, %v529
        %v531 = vpop.f32.mrb[0].mxu0
        %v532 = vadd.f32 0.0, %v531
        %v533 = vpop.f32.mrb[0].mxu0
        %v534 = vpop.f32.mrb[0].mxu0
        %535 = vdwg.mxu0
        %v536 = vtanh.pop %v530
        %v537 = vtanh.pop %v532
        %v538 = vpack.c.bf16 %v536, %v536
        %v539 = vpack.c.bf16 %v537, %v537
        %v540 = vld [vmem:[%s3] sm:$0xf]
        %v541 = vld [vmem:[%s3 + $0x4] sm:$0xf]
        %v542 = vld [vmem:[%s3 + $0x8] sm:$0xf]
        %v543 = vld [vmem:[%s3 + $0xc] sm:$0xf]
        %v544 = vld [vmem:[%s3 + $0x10] sm:$0xf]
        %v545 = vld [vmem:[%s3 + $0x14] sm:$0xf]
        %v546 = vld [vmem:[%s3 + $0x18] sm:$0xf]
        %v547 = vld [vmem:[%s3 + $0x1c] sm:$0xf]
        %v548 = vld [vmem:[%s3 + $0x20] sm:$0xf]
        %v549 = vld [vmem:[%s3 + $0x24] sm:$0xf]
        %v550 = vld [vmem:[%s3 + $0x28] sm:$0xf]
        %v551 = vld [vmem:[%s3 + $0x2c] sm:$0xf]
        %v552 = vld [vmem:[%s3 + $0x30] sm:$0xf]
        %v553 = vld [vmem:[%s3 + $0x34] sm:$0xf]
        %v554 = vld [vmem:[%s3 + $0x38] sm:$0xf]
        %v555 = vld [vmem:[%s3 + $0x3c] sm:$0xf]
        %v556 = vld [vmem:[%s3 + $0x40] sm:$0xf]
        %v557 = vld [vmem:[%s3 + $0x44] sm:$0xf]
        %v558 = vld [vmem:[%s3 + $0x48] sm:$0xf]
        %v559 = vld [vmem:[%s3 + $0x4c] sm:$0xf]
        %v560 = vld [vmem:[%s3 + $0x50] sm:$0xf]
        %v561 = vld [vmem:[%s3 + $0x54] sm:$0xf]
        %v562 = vld [vmem:[%s3 + $0x58] sm:$0xf]
        %v563 = vld [vmem:[%s3 + $0x5c] sm:$0xf]
        %v564 = vld [vmem:[%s3 + $0x60] sm:$0xf]
        %v565 = vld [vmem:[%s3 + $0x64] sm:$0xf]
        %v566 = vld [vmem:[%s3 + $0x68] sm:$0xf]
        %v567 = vld [vmem:[%s3 + $0x6c] sm:$0xf]
        %v568 = vld [vmem:[%s3 + $0x70] sm:$0xf]
        %v569 = vld [vmem:[%s3 + $0x74] sm:$0xf]
        %v570 = vld [vmem:[%s3 + $0x78] sm:$0xf]
        %v571 = vld [vmem:[%s3 + $0x7c] sm:$0xf]
        %v572 = vld [vmem:[%s293] sm:$0xff]
        %v605 = vunpack.c.l.b16 %v540
        %v606 = vunpack.c.l.b16 %v541
        %v607 = vunpack.c.l.b16 %v542
        %v608 = vunpack.c.l.b16 %v543
        %v609 = vunpack.c.l.b16 %v544
        %v610 = vunpack.c.l.b16 %v545
        %v611 = vunpack.c.l.b16 %v546
        %v612 = vunpack.c.l.b16 %v547
        %v613 = vunpack.c.l.b16 %v548
        %v614 = vunpack.c.l.b16 %v549
        %v615 = vunpack.c.l.b16 %v550
        %v616 = vunpack.c.l.b16 %v551
        %v617 = vunpack.c.l.b16 %v552
        %v618 = vunpack.c.l.b16 %v553
        %v619 = vunpack.c.l.b16 %v554
        %v620 = vunpack.c.l.b16 %v555
        %v621 = vunpack.c.l.b16 %v556
        %v622 = vunpack.c.l.b16 %v557
        %v623 = vunpack.c.l.b16 %v558
        %v624 = vunpack.c.l.b16 %v559
        %v625 = vunpack.c.l.b16 %v560
        %v626 = vunpack.c.l.b16 %v561
        %v627 = vunpack.c.l.b16 %v562
        %v628 = vunpack.c.l.b16 %v563
        %v629 = vunpack.c.l.b16 %v564
        %v630 = vunpack.c.l.b16 %v565
        %v631 = vunpack.c.l.b16 %v566
        %v632 = vunpack.c.l.b16 %v567
        %v633 = vunpack.c.l.b16 %v568
        %v634 = vunpack.c.l.b16 %v569
        %v635 = vunpack.c.l.b16 %v570
        %v636 = vunpack.c.l.b16 %v571
        %v637 = vpack.c.b16 %v606, %v605
        %v638 = vpack.c.b16 %v608, %v607
        %v639 = vpack.c.b16 %v610, %v609
        %v640 = vpack.c.b16 %v612, %v611
        %v641 = vpack.c.b16 %v614, %v613
        %v642 = vpack.c.b16 %v616, %v615
        %v643 = vpack.c.b16 %v618, %v617
        %v644 = vpack.c.b16 %v620, %v619
        %v645 = vpack.c.b16 %v622, %v621
        %v646 = vpack.c.b16 %v624, %v623
        %v647 = vpack.c.b16 %v626, %v625
        %v648 = vpack.c.b16 %v628, %v627
        %v649 = vpack.c.b16 %v630, %v629
        %v650 = vpack.c.b16 %v632, %v631
        %v651 = vpack.c.b16 %v634, %v633
        %v652 = vpack.c.b16 %v636, %v635
        %669 = vmatprep.subr.bf16.mxu0 0
        %670 = vmatpush1.bf16.msra.mxu0 %v637
        %671 = vmatprep.subr.bf16.mxu0 0
        %672 = vmatpush1.bf16.msra.mxu0 %v638
        %673 = vmatprep.subr.bf16.mxu0 0
        %674 = vmatpush1.bf16.msra.mxu0 %v639
        %675 = vmatprep.subr.bf16.mxu0 0
        %676 = vmatpush1.bf16.msra.mxu0 %v640
        %677 = vmatprep.subr.bf16.mxu0 0
        %678 = vmatpush1.bf16.msra.mxu0 %v641
        %679 = vmatprep.subr.bf16.mxu0 0
        %680 = vmatpush1.bf16.msra.mxu0 %v642
        %681 = vmatprep.subr.bf16.mxu0 0
        %682 = vmatpush1.bf16.msra.mxu0 %v643
        %683 = vmatprep.subr.bf16.mxu0 0
        %684 = vmatpush1.bf16.msra.mxu0 %v644
        %685 = vmatprep.subr.bf16.mxu0 0
        %686 = vmatpush1.bf16.msra.mxu0 %v645
        %687 = vmatprep.subr.bf16.mxu0 0
        %688 = vmatpush1.bf16.msra.mxu0 %v646
        %689 = vmatprep.subr.bf16.mxu0 0
        %690 = vmatpush1.bf16.msra.mxu0 %v647
        %691 = vmatprep.subr.bf16.mxu0 0
        %692 = vmatpush1.bf16.msra.mxu0 %v648
        %693 = vmatprep.subr.bf16.mxu0 0
        %694 = vmatpush1.bf16.msra.mxu0 %v649
        %695 = vmatprep.subr.bf16.mxu0 0
        %696 = vmatpush1.bf16.msra.mxu0 %v650
        %697 = vmatprep.subr.bf16.mxu0 0
        %698 = vmatpush1.bf16.msra.mxu0 %v651
        %699 = vmatprep.subr.bf16.mxu0 0
        %700 = vmatpush1.bf16.msra.mxu0 %v652
        %701 = vmatprep.mubr.bf16.mxu0 %v539
        %702 = vmatmul.mubr.bf16.gmra.mrb[0].mxu0 %v538
        %v703 = vpop.f32.mrb[0].mxu0
        %v704 = vadd.f32 %v572, %v703
        %v705 = vpop.f32.mrb[0].mxu0
        %v706 = vpop.f32.mrb[0].mxu0
        %v707 = vpop.f32.mrb[0].mxu0
        %708 = vdwg.mxu0
        %vm709 = vcmask 261120
        %v710 = vsel %vm709, %v704, -inf
        %711 = vmax.xlane.f32.xlu0 %v710
        %v712 = vpop.xlane.xlu0 %711
        %v713 = vsub.f32 %v704, %v712
        %v714 = vmul.f32 %v713, 1.442695
        %v715 = vpow.pop %v714
        %v716 = vld [vmem:[%s4] sm:$0xff]
        %v717 = vld [vmem:[%s4 + $0x8] sm:$0xff]
        %v718 = vld [vmem:[%s4 + $0x10] sm:$0xff]
        %v719 = vld [vmem:[%s4 + $0x18] sm:$0xff]
        %v721 = vsel %vm709, %v715, 0
        %723 = vmatprep.subr.mxu0 0.0
        %724 = vmatpush1.msra.mxu0 %v716
        %725 = vmatprep.subr.mxu0 0.0
        %726 = vmatpush1.msra.mxu0 %v717
        %727 = vmatprep.subr.mxu0 0.0
        %728 = vmatpush1.msra.mxu0 %v718
        %729 = vmatprep.subr.mxu0 0.0
        %730 = vmatpush1.msra.mxu0 %v719
        %731 = vmatprep.subr.mxu0 0.0
        %732 = vmatpush1.msra.mxu0 0.0
        %733 = vmatprep.subr.mxu0 0.0
        %734 = vmatpush1.msra.mxu0 0.0
        %735 = vmatprep.subr.mxu0 0.0
        %736 = vmatpush1.msra.mxu0 0.0
        %737 = vmatprep.subr.mxu0 0.0
        %738 = vmatpush1.msra.mxu0 0.0
        %739 = vmatprep.subr.mxu0 0.0
        %740 = vmatpush1.msra.mxu0 0.0
        %741 = vmatprep.subr.mxu0 0.0
        %742 = vmatpush1.msra.mxu0 0.0
        %743 = vmatprep.subr.mxu0 0.0
        %744 = vmatpush1.msra.mxu0 0.0
        %745 = vmatprep.subr.mxu0 0.0
        %746 = vmatpush1.msra.mxu0 0.0
        %747 = vmatprep.subr.mxu0 0.0
        %748 = vmatpush1.msra.mxu0 0.0
        %749 = vmatprep.subr.mxu0 0.0
        %750 = vmatpush1.msra.mxu0 0.0
        %751 = vmatprep.subr.mxu0 0.0
        %752 = vmatpush1.msra.mxu0 0.0
        %753 = vmatprep.subr.mxu0 0.0
        %754 = vmatpush1.msra.mxu0 0.0
        %755 = vmatprep.subr.mxu0 0.0
        %756 = vmatpush1.msra.mxu0 0.0
        %757 = vmatprep.subr.mxu0 0.0
        %758 = vmatpush1.msra.mxu0 0.0
        %759 = vmatprep.subr.mxu0 0.0
        %760 = vmatpush1.msra.mxu0 0.0
        %761 = vmatprep.subr.mxu0 0.0
        %762 = vmatpush1.msra.mxu0 0.0
        %763 = vmatprep.subr.mxu0 0.0
        %764 = vmatpush1.msra.mxu0 0.0
        %765 = vmatprep.subr.mxu0 0.0
        %766 = vmatpush1.msra.mxu0 0.0
        %767 = vmatprep.subr.mxu0 0.0
        %768 = vmatpush1.msra.mxu0 0.0
        %769 = vmatprep.subr.mxu0 0.0
        %770 = vmatpush1.msra.mxu0 0.0
        %771 = vmatprep.subr.mxu0 0.0
        %772 = vmatpush1.msra.mxu0 0.0
        %773 = vmatprep.subr.mxu0 0.0
        %774 = vmatpush1.msra.mxu0 0.0
        %775 = vmatprep.subr.mxu0 0.0
        %776 = vmatpush1.msra.mxu0 0.0
        %777 = vmatprep.subr.mxu0 0.0
        %778 = vmatpush1.msra.mxu0 0.0
        %779 = vmatprep.subr.mxu0 0.0
        %780 = vmatpush1.msra.mxu0 0.0
        %781 = vmatprep.subr.mxu0 0.0
        %782 = vmatpush1.msra.mxu0 0.0
        %783 = vmatprep.subr.mxu0 0.0
        %784 = vmatpush1.msra.mxu0 0.0
        %785 = vmatprep.subr.mxu0 0.0
        %786 = vmatpush1.msra.mxu0 0.0
        %787 = vmatprep.mubr.f32.mxu0 0.0
        %788 = vmatmul.mubr.f32.gmra.mrb[0].mxu0 %v721
        %v789 = vpop.f32.mrb[0].mxu0
        %v790 = vadd.f32 0.0, %v789
        %v791 = vpop.f32.mrb[0].mxu0
        %792 = vdwg.mxu0
        %v793 = vrcp.pop %v790
        %v794 = vmul.f32 %v715, %v793
        %v795 = vld [vmem:[%s5] sm:$0xff]
        %v796 = vld [vmem:[%s5 + $0x8] sm:$0xff]
        %v797 = vld [vmem:[%s5 + $0x10] sm:$0xff]
        %v798 = vld [vmem:[%s5 + $0x18] sm:$0xff]
        %v799 = vld [vmem:[%s5 + $0x20] sm:$0xff]
        %v800 = vld [vmem:[%s5 + $0x28] sm:$0xff]
        %v801 = vld [vmem:[%s5 + $0x30] sm:$0xff]
        %v802 = vld [vmem:[%s5 + $0x38] sm:$0xff]
        %v803 = vld [vmem:[%s5 + $0x40] sm:$0xff]
        %v804 = vld [vmem:[%s5 + $0x48] sm:$0xff]
        %v805 = vld [vmem:[%s5 + $0x50] sm:$0xff]
        %v806 = vld [vmem:[%s5 + $0x58] sm:$0xff]
        %v807 = vld [vmem:[%s5 + $0x60] sm:$0xff]
        %v808 = vld [vmem:[%s5 + $0x68] sm:$0xff]
        %v809 = vld [vmem:[%s5 + $0x70] sm:$0xff]
        %v810 = vld [vmem:[%s5 + $0x78] sm:$0xff]
        %v811 = vld [vmem:[%s5 + $0x80] sm:$0xff]
        %v812 = vld [vmem:[%s5 + $0x88] sm:$0xff]
        %v813 = vld [vmem:[%s5 + $0x90] sm:$0xff]
        %v814 = vld [vmem:[%s5 + $0x98] sm:$0xff]
        %v815 = vld [vmem:[%s5 + $0xa0] sm:$0xff]
        %v816 = vld [vmem:[%s5 + $0xa8] sm:$0xff]
        %v817 = vld [vmem:[%s5 + $0xb0] sm:$0xff]
        %v818 = vld [vmem:[%s5 + $0xb8] sm:$0xff]
        %v819 = vld [vmem:[%s5 + $0xc0] sm:$0xff]
        %v820 = vld [vmem:[%s5 + $0xc8] sm:$0xff]
        %v821 = vld [vmem:[%s5 + $0xd0] sm:$0xff]
        %v822 = vld [vmem:[%s5 + $0xd8] sm:$0xff]
        %v823 = vld [vmem:[%s5 + $0xe0] sm:$0xff]
        %v824 = vld [vmem:[%s5 + $0xe8] sm:$0xff]
        %v825 = vld [vmem:[%s5 + $0xf0] sm:$0xff]
        %v826 = vld [vmem:[%s5 + $0xf8] sm:$0xff]
        %v828 = vsel %vm709, %v794, 0
        %830 = vmatprep.subr.mxu0 %v796
        %831 = vmatpush1.msra.mxu0 %v795
        %832 = vmatprep.subr.mxu0 %v804
        %833 = vmatpush1.msra.mxu0 %v803
        %834 = vmatprep.subr.mxu0 %v812
        %835 = vmatpush1.msra.mxu0 %v811
        %836 = vmatprep.subr.mxu0 %v820
        %837 = vmatpush1.msra.mxu0 %v819
        %838 = vmatprep.subr.mxu0 0.0
        %839 = vmatpush1.msra.mxu0 0.0
        %840 = vmatprep.subr.mxu0 0.0
        %841 = vmatpush1.msra.mxu0 0.0
        %842 = vmatprep.subr.mxu0 0.0
        %843 = vmatpush1.msra.mxu0 0.0
        %844 = vmatprep.subr.mxu0 0.0
        %845 = vmatpush1.msra.mxu0 0.0
        %846 = vmatprep.subr.mxu0 0.0
        %847 = vmatpush1.msra.mxu0 0.0
        %848 = vmatprep.subr.mxu0 0.0
        %849 = vmatpush1.msra.mxu0 0.0
        %850 = vmatprep.subr.mxu0 0.0
        %851 = vmatpush1.msra.mxu0 0.0
        %852 = vmatprep.subr.mxu0 0.0
        %853 = vmatpush1.msra.mxu0 0.0
        %854 = vmatprep.subr.mxu0 0.0
        %855 = vmatpush1.msra.mxu0 0.0
        %856 = vmatprep.subr.mxu0 0.0
        %857 = vmatpush1.msra.mxu0 0.0
        %858 = vmatprep.subr.mxu0 0.0
        %859 = vmatpush1.msra.mxu0 0.0
        %860 = vmatprep.subr.mxu0 0.0
        %861 = vmatpush1.msra.mxu0 0.0
        %862 = vmatprep.subr.mxu0 0.0
        %863 = vmatpush1.msra.mxu0 0.0
        %864 = vmatprep.subr.mxu0 0.0
        %865 = vmatpush1.msra.mxu0 0.0
        %866 = vmatprep.subr.mxu0 0.0
        %867 = vmatpush1.msra.mxu0 0.0
        %868 = vmatprep.subr.mxu0 0.0
        %869 = vmatpush1.msra.mxu0 0.0
        %870 = vmatprep.subr.mxu0 0.0
        %871 = vmatpush1.msra.mxu0 0.0
        %872 = vmatprep.subr.mxu0 0.0
        %873 = vmatpush1.msra.mxu0 0.0
        %874 = vmatprep.subr.mxu0 0.0
        %875 = vmatpush1.msra.mxu0 0.0
        %876 = vmatprep.subr.mxu0 0.0
        %877 = vmatpush1.msra.mxu0 0.0
        %878 = vmatprep.subr.mxu0 0.0
        %879 = vmatpush1.msra.mxu0 0.0
        %880 = vmatprep.subr.mxu0 0.0
        %881 = vmatpush1.msra.mxu0 0.0
        %882 = vmatprep.subr.mxu0 0.0
        %883 = vmatpush1.msra.mxu0 0.0
        %884 = vmatprep.subr.mxu0 0.0
        %885 = vmatpush1.msra.mxu0 0.0
        %886 = vmatprep.subr.mxu0 0.0
        %887 = vmatpush1.msra.mxu0 0.0
        %888 = vmatprep.subr.mxu0 0.0
        %889 = vmatpush1.msra.mxu0 0.0
        %890 = vmatprep.subr.mxu0 0.0
        %891 = vmatpush1.msra.mxu0 0.0
        %892 = vmatprep.subr.mxu0 0.0
        %893 = vmatpush1.msra.mxu0 0.0
        %894 = vmatprep.mubr.f32.mxu0 0.0
        %895 = vmatmul.mubr.f32.gmra.mrb[0].mxu0 %v828
        %v896 = vpop.f32.mrb[0].mxu0
        %v897 = vadd.f32 0.0, %v896
        %v898 = vpop.f32.mrb[0].mxu0
        %v899 = vadd.f32 0.0, %v898
        %900 = vdwg.mxu0
        %901 = vmatprep.subr.mxu0 %v798
        %902 = vmatpush1.msra.mxu0 %v797
        %903 = vmatprep.subr.mxu0 %v806
        %904 = vmatpush1.msra.mxu0 %v805
        %905 = vmatprep.subr.mxu0 %v814
        %906 = vmatpush1.msra.mxu0 %v813
        %907 = vmatprep.subr.mxu0 %v822
        %908 = vmatpush1.msra.mxu0 %v821
        %909 = vmatprep.subr.mxu0 0.0
        %910 = vmatpush1.msra.mxu0 0.0
        %911 = vmatprep.subr.mxu0 0.0
        %912 = vmatpush1.msra.mxu0 0.0
        %913 = vmatprep.subr.mxu0 0.0
        %914 = vmatpush1.msra.mxu0 0.0
        %915 = vmatprep.subr.mxu0 0.0
        %916 = vmatpush1.msra.mxu0 0.0
        %917 = vmatprep.subr.mxu0 0.0
        %918 = vmatpush1.msra.mxu0 0.0
        %919 = vmatprep.subr.mxu0 0.0
        %920 = vmatpush1.msra.mxu0 0.0
        %921 = vmatprep.subr.mxu0 0.0
        %922 = vmatpush1.msra.mxu0 0.0
        %923 = vmatprep.subr.mxu0 0.0
        %924 = vmatpush1.msra.mxu0 0.0
        %925 = vmatprep.subr.mxu0 0.0
        %926 = vmatpush1.msra.mxu0 0.0
        %927 = vmatprep.subr.mxu0 0.0
        %928 = vmatpush1.msra.mxu0 0.0
        %929 = vmatprep.subr.mxu0 0.0
        %930 = vmatpush1.msra.mxu0 0.0
        %931 = vmatprep.subr.mxu0 0.0
        %932 = vmatpush1.msra.mxu0 0.0
        %933 = vmatprep.subr.mxu0 0.0
        %934 = vmatpush1.msra.mxu0 0.0
        %935 = vmatprep.subr.mxu0 0.0
        %936 = vmatpush1.msra.mxu0 0.0
        %937 = vmatprep.subr.mxu0 0.0
        %938 = vmatpush1.msra.mxu0 0.0
        %939 = vmatprep.subr.mxu0 0.0
        %940 = vmatpush1.msra.mxu0 0.0
        %941 = vmatprep.subr.mxu0 0.0
        %942 = vmatpush1.msra.mxu0 0.0
        %943 = vmatprep.subr.mxu0 0.0
        %944 = vmatpush1.msra.mxu0 0.0
        %945 = vmatprep.subr.mxu0 0.0
        %946 = vmatpush1.msra.mxu0 0.0
        %947 = vmatprep.subr.mxu0 0.0
        %948 = vmatpush1.msra.mxu0 0.0
        %949 = vmatprep.subr.mxu0 0.0
        %950 = vmatpush1.msra.mxu0 0.0
        %951 = vmatprep.subr.mxu0 0.0
        %952 = vmatpush1.msra.mxu0 0.0
        %953 = vmatprep.subr.mxu0 0.0
        %954 = vmatpush1.msra.mxu0 0.0
        %955 = vmatprep.subr.mxu0 0.0
        %956 = vmatpush1.msra.mxu0 0.0
        %957 = vmatprep.subr.mxu0 0.0
        %958 = vmatpush1.msra.mxu0 0.0
        %959 = vmatprep.subr.mxu0 0.0
        %960 = vmatpush1.msra.mxu0 0.0
        %961 = vmatprep.subr.mxu0 0.0
        %962 = vmatpush1.msra.mxu0 0.0
        %963 = vmatprep.subr.mxu0 0.0
        %964 = vmatpush1.msra.mxu0 0.0
        %965 = vmatprep.mubr.f32.mxu0 0.0
        %966 = vmatmul.mubr.f32.gmra.mrb[0].mxu0 %v828
        %v967 = vpop.f32.mrb[0].mxu0
        %v968 = vadd.f32 0.0, %v967
        %v969 = vpop.f32.mrb[0].mxu0
        %v970 = vadd.f32 0.0, %v969
        %971 = vdwg.mxu0
        %972 = vmatprep.subr.mxu0 %v800
        %973 = vmatpush1.msra.mxu0 %v799
        %974 = vmatprep.subr.mxu0 %v808
        %975 = vmatpush1.msra.mxu0 %v807
        %976 = vmatprep.subr.mxu0 %v816
        %977 = vmatpush1.msra.mxu0 %v815
        %978 = vmatprep.subr.mxu0 %v824
        %979 = vmatpush1.msra.mxu0 %v823
        %980 = vmatprep.subr.mxu0 0.0
        %981 = vmatpush1.msra.mxu0 0.0
        %982 = vmatprep.subr.mxu0 0.0
        %983 = vmatpush1.msra.mxu0 0.0
        %984 = vmatprep.subr.mxu0 0.0
        %985 = vmatpush1.msra.mxu0 0.0
        %986 = vmatprep.subr.mxu0 0.0
        %987 = vmatpush1.msra.mxu0 0.0
        %988 = vmatprep.subr.mxu0 0.0
        %989 = vmatpush1.msra.mxu0 0.0
        %990 = vmatprep.subr.mxu0 0.0
        %991 = vmatpush1.msra.mxu0 0.0
        %992 = vmatprep.subr.mxu0 0.0
        %993 = vmatpush1.msra.mxu0 0.0
        %994 = vmatprep.subr.mxu0 0.0
        %995 = vmatpush1.msra.mxu0 0.0
        %996 = vmatprep.subr.mxu0 0.0
        %997 = vmatpush1.msra.mxu0 0.0
        %998 = vmatprep.subr.mxu0 0.0
        %999 = vmatpush1.msra.mxu0 0.0
        %1000 = vmatprep.subr.mxu0 0.0
        %1001 = vmatpush1.msra.mxu0 0.0
        %1002 = vmatprep.subr.mxu0 0.0
        %1003 = vmatpush1.msra.mxu0 0.0
        %1004 = vmatprep.subr.mxu0 0.0
        %1005 = vmatpush1.msra.mxu0 0.0
        %1006 = vmatprep.subr.mxu0 0.0
        %1007 = vmatpush1.msra.mxu0 0.0
        %1008 = vmatprep.subr.mxu0 0.0
        %1009 = vmatpush1.msra.mxu0 0.0
        %1010 = vmatprep.subr.mxu0 0.0
        %1011 = vmatpush1.msra.mxu0 0.0
        %1012 = vmatprep.subr.mxu0 0.0
        %1013 = vmatpush1.msra.mxu0 0.0
        %1014 = vmatprep.subr.mxu0 0.0
        %1015 = vmatpush1.msra.mxu0 0.0
        %1016 = vmatprep.subr.mxu0 0.0
        %1017 = vmatpush1.msra.mxu0 0.0
        %1018 = vmatprep.subr.mxu0 0.0
        %1019 = vmatpush1.msra.mxu0 0.0
        %1020 = vmatprep.subr.mxu0 0.0
        %1021 = vmatpush1.msra.mxu0 0.0
        %1022 = vmatprep.subr.mxu0 0.0
        %1023 = vmatpush1.msra.mxu0 0.0
        %1024 = vmatprep.subr.mxu0 0.0
        %1025 = vmatpush1.msra.mxu0 0.0
        %1026 = vmatprep.subr.mxu0 0.0
        %1027 = vmatpush1.msra.mxu0 0.0
        %1028 = vmatprep.subr.mxu0 0.0
        %1029 = vmatpush1.msra.mxu0 0.0
        %1030 = vmatprep.subr.mxu0 0.0
        %1031 = vmatpush1.msra.mxu0 0.0
        %1032 = vmatprep.subr.mxu0 0.0
        %1033 = vmatpush1.msra.mxu0 0.0
        %1034 = vmatprep.subr.mxu0 0.0
        %1035 = vmatpush1.msra.mxu0 0.0
        %1036 = vmatprep.mubr.f32.mxu0 0.0
        %1037 = vmatmul.mubr.f32.gmra.mrb[0].mxu0 %v828
        %v1038 = vpop.f32.mrb[0].mxu0
        %v1039 = vadd.f32 0.0, %v1038
        %v1040 = vpop.f32.mrb[0].mxu0
        %v1041 = vadd.f32 0.0, %v1040
        %1042 = vdwg.mxu0
        %1043 = vmatprep.subr.mxu0 %v802
        %1044 = vmatpush1.msra.mxu0 %v801
        %1045 = vmatprep.subr.mxu0 %v810
        %1046 = vmatpush1.msra.mxu0 %v809
        %1047 = vmatprep.subr.mxu0 %v818
        %1048 = vmatpush1.msra.mxu0 %v817
        %1049 = vmatprep.subr.mxu0 %v826
        %1050 = vmatpush1.msra.mxu0 %v825
        %1051 = vmatprep.subr.mxu0 0.0
        %1052 = vmatpush1.msra.mxu0 0.0
        %1053 = vmatprep.subr.mxu0 0.0
        %1054 = vmatpush1.msra.mxu0 0.0
        %1055 = vmatprep.subr.mxu0 0.0
        %1056 = vmatpush1.msra.mxu0 0.0
        %1057 = vmatprep.subr.mxu0 0.0
        %1058 = vmatpush1.msra.mxu0 0.0
        %1059 = vmatprep.subr.mxu0 0.0
        %1060 = vmatpush1.msra.mxu0 0.0
        %1061 = vmatprep.subr.mxu0 0.0
        %1062 = vmatpush1.msra.mxu0 0.0
        %1063 = vmatprep.subr.mxu0 0.0
        %1064 = vmatpush1.msra.mxu0 0.0
        %1065 = vmatprep.subr.mxu0 0.0
        %1066 = vmatpush1.msra.mxu0 0.0
        %1067 = vmatprep.subr.mxu0 0.0
        %1068 = vmatpush1.msra.mxu0 0.0
        %1069 = vmatprep.subr.mxu0 0.0
        %1070 = vmatpush1.msra.mxu0 0.0
        %1071 = vmatprep.subr.mxu0 0.0
        %1072 = vmatpush1.msra.mxu0 0.0
        %1073 = vmatprep.subr.mxu0 0.0
        %1074 = vmatpush1.msra.mxu0 0.0
        %1075 = vmatprep.subr.mxu0 0.0
        %1076 = vmatpush1.msra.mxu0 0.0
        %1077 = vmatprep.subr.mxu0 0.0
        %1078 = vmatpush1.msra.mxu0 0.0
        %1079 = vmatprep.subr.mxu0 0.0
        %1080 = vmatpush1.msra.mxu0 0.0
        %1081 = vmatprep.subr.mxu0 0.0
        %1082 = vmatpush1.msra.mxu0 0.0
        %1083 = vmatprep.subr.mxu0 0.0
        %1084 = vmatpush1.msra.mxu0 0.0
        %1085 = vmatprep.subr.mxu0 0.0
        %1086 = vmatpush1.msra.mxu0 0.0
        %1087 = vmatprep.subr.mxu0 0.0
        %1088 = vmatpush1.msra.mxu0 0.0
        %1089 = vmatprep.subr.mxu0 0.0
        %1090 = vmatpush1.msra.mxu0 0.0
        %1091 = vmatprep.subr.mxu0 0.0
        %1092 = vmatpush1.msra.mxu0 0.0
        %1093 = vmatprep.subr.mxu0 0.0
        %1094 = vmatpush1.msra.mxu0 0.0
        %1095 = vmatprep.subr.mxu0 0.0
        %1096 = vmatpush1.msra.mxu0 0.0
        %1097 = vmatprep.subr.mxu0 0.0
        %1098 = vmatpush1.msra.mxu0 0.0
        %1099 = vmatprep.subr.mxu0 0.0
        %1100 = vmatpush1.msra.mxu0 0.0
        %1101 = vmatprep.subr.mxu0 0.0
        %1102 = vmatpush1.msra.mxu0 0.0
        %1103 = vmatprep.subr.mxu0 0.0
        %1104 = vmatpush1.msra.mxu0 0.0
        %1105 = vmatprep.subr.mxu0 0.0
        %1106 = vmatpush1.msra.mxu0 0.0
        %1107 = vmatprep.mubr.f32.mxu0 0.0
        %1108 = vmatmul.mubr.f32.gmra.mrb[0].mxu0 %v828
        %v1109 = vpop.f32.mrb[0].mxu0
        %v1110 = vadd.f32 0.0, %v1109
        %v1111 = vpop.f32.mrb[0].mxu0
        %v1112 = vadd.f32 0.0, %v1111
        %1113 = vdwg.mxu0
        %v1114 = vld [vmem:[%s6] sm:$0xff]
        %v1115 = vld [vmem:[%s6 + $0x8] sm:$0xff]
        %v1116 = vld [vmem:[%s6 + $0x10] sm:$0xff]
        %v1117 = vld [vmem:[%s6 + $0x18] sm:$0xff]
        %v1118 = vld [vmem:[%s6 + $0x20] sm:$0xff]
        %v1119 = vld [vmem:[%s6 + $0x28] sm:$0xff]
        %v1120 = vld [vmem:[%s6 + $0x30] sm:$0xff]
        %v1121 = vld [vmem:[%s6 + $0x38] sm:$0xff]
        %v1122 = vld [vmem:[%s6 + $0x40] sm:$0xff]
        %v1123 = vld [vmem:[%s6 + $0x48] sm:$0xff]
        %v1124 = vld [vmem:[%s6 + $0x50] sm:$0xff]
        %v1125 = vld [vmem:[%s6 + $0x58] sm:$0xff]
        %v1126 = vld [vmem:[%s6 + $0x60] sm:$0xff]
        %v1127 = vld [vmem:[%s6 + $0x68] sm:$0xff]
        %v1128 = vld [vmem:[%s6 + $0x70] sm:$0xff]
        %v1129 = vld [vmem:[%s6 + $0x78] sm:$0xff]
        %v1130 = vld [vmem:[%s6 + $0x80] sm:$0xff]
        %v1131 = vld [vmem:[%s6 + $0x88] sm:$0xff]
        %v1132 = vld [vmem:[%s6 + $0x90] sm:$0xff]
        %v1133 = vld [vmem:[%s6 + $0x98] sm:$0xff]
        %v1134 = vld [vmem:[%s6 + $0xa0] sm:$0xff]
        %v1135 = vld [vmem:[%s6 + $0xa8] sm:$0xff]
        %v1136 = vld [vmem:[%s6 + $0xb0] sm:$0xff]
        %v1137 = vld [vmem:[%s6 + $0xb8] sm:$0xff]
        %v1138 = vld [vmem:[%s6 + $0xc0] sm:$0xff]
        %v1139 = vld [vmem:[%s6 + $0xc8] sm:$0xff]
        %v1140 = vld [vmem:[%s6 + $0xd0] sm:$0xff]
        %v1141 = vld [vmem:[%s6 + $0xd8] sm:$0xff]
        %v1142 = vld [vmem:[%s6 + $0xe0] sm:$0xff]
        %v1143 = vld [vmem:[%s6 + $0xe8] sm:$0xff]
        %v1144 = vld [vmem:[%s6 + $0xf0] sm:$0xff]
        %v1145 = vld [vmem:[%s6 + $0xf8] sm:$0xff]
        %v1146 = vld [vmem:[%s6 + $0x100] sm:$0xff]
        %v1147 = vld [vmem:[%s6 + $0x108] sm:$0xff]
        %v1148 = vld [vmem:[%s6 + $0x110] sm:$0xff]
        %v1149 = vld [vmem:[%s6 + $0x118] sm:$0xff]
        %v1150 = vld [vmem:[%s6 + $0x120] sm:$0xff]
        %v1151 = vld [vmem:[%s6 + $0x128] sm:$0xff]
        %v1152 = vld [vmem:[%s6 + $0x130] sm:$0xff]
        %v1153 = vld [vmem:[%s6 + $0x138] sm:$0xff]
        %v1154 = vld [vmem:[%s6 + $0x140] sm:$0xff]
        %v1155 = vld [vmem:[%s6 + $0x148] sm:$0xff]
        %v1156 = vld [vmem:[%s6 + $0x150] sm:$0xff]
        %v1157 = vld [vmem:[%s6 + $0x158] sm:$0xff]
        %v1158 = vld [vmem:[%s6 + $0x160] sm:$0xff]
        %v1159 = vld [vmem:[%s6 + $0x168] sm:$0xff]
        %v1160 = vld [vmem:[%s6 + $0x170] sm:$0xff]
        %v1161 = vld [vmem:[%s6 + $0x178] sm:$0xff]
        %v1162 = vld [vmem:[%s6 + $0x180] sm:$0xff]
        %v1163 = vld [vmem:[%s6 + $0x188] sm:$0xff]
        %v1164 = vld [vmem:[%s6 + $0x190] sm:$0xff]
        %v1165 = vld [vmem:[%s6 + $0x198] sm:$0xff]
        %v1166 = vld [vmem:[%s6 + $0x1a0] sm:$0xff]
        %v1167 = vld [vmem:[%s6 + $0x1a8] sm:$0xff]
        %v1168 = vld [vmem:[%s6 + $0x1b0] sm:$0xff]
        %v1169 = vld [vmem:[%s6 + $0x1b8] sm:$0xff]
        %v1170 = vld [vmem:[%s6 + $0x1c0] sm:$0xff]
        %v1171 = vld [vmem:[%s6 + $0x1c8] sm:$0xff]
        %v1172 = vld [vmem:[%s6 + $0x1d0] sm:$0xff]
        %v1173 = vld [vmem:[%s6 + $0x1d8] sm:$0xff]
        %v1174 = vld [vmem:[%s6 + $0x1e0] sm:$0xff]
        %v1175 = vld [vmem:[%s6 + $0x1e8] sm:$0xff]
        %v1176 = vld [vmem:[%s6 + $0x1f0] sm:$0xff]
        %v1177 = vld [vmem:[%s6 + $0x1f8] sm:$0xff]
        %v1178 = vld [vmem:[%s6 + $0x200] sm:$0xff]
        %v1179 = vld [vmem:[%s6 + $0x208] sm:$0xff]
        %v1180 = vld [vmem:[%s6 + $0x210] sm:$0xff]
        %v1181 = vld [vmem:[%s6 + $0x218] sm:$0xff]
        %v1182 = vld [vmem:[%s6 + $0x220] sm:$0xff]
        %v1183 = vld [vmem:[%s6 + $0x228] sm:$0xff]
        %v1184 = vld [vmem:[%s6 + $0x230] sm:$0xff]
        %v1185 = vld [vmem:[%s6 + $0x238] sm:$0xff]
        %v1186 = vld [vmem:[%s6 + $0x240] sm:$0xff]
        %v1187 = vld [vmem:[%s6 + $0x248] sm:$0xff]
        %v1188 = vld [vmem:[%s6 + $0x250] sm:$0xff]
        %v1189 = vld [vmem:[%s6 + $0x258] sm:$0xff]
        %v1190 = vld [vmem:[%s6 + $0x260] sm:$0xff]
        %v1191 = vld [vmem:[%s6 + $0x268] sm:$0xff]
        %v1192 = vld [vmem:[%s6 + $0x270] sm:$0xff]
        %v1193 = vld [vmem:[%s6 + $0x278] sm:$0xff]
        %v1194 = vld [vmem:[%s6 + $0x280] sm:$0xff]
        %v1195 = vld [vmem:[%s6 + $0x288] sm:$0xff]
        %v1196 = vld [vmem:[%s6 + $0x290] sm:$0xff]
        %v1197 = vld [vmem:[%s6 + $0x298] sm:$0xff]
        %v1198 = vld [vmem:[%s6 + $0x2a0] sm:$0xff]
        %v1199 = vld [vmem:[%s6 + $0x2a8] sm:$0xff]
        %v1200 = vld [vmem:[%s6 + $0x2b0] sm:$0xff]
        %v1201 = vld [vmem:[%s6 + $0x2b8] sm:$0xff]
        %v1202 = vld [vmem:[%s6 + $0x2c0] sm:$0xff]
        %v1203 = vld [vmem:[%s6 + $0x2c8] sm:$0xff]
        %v1204 = vld [vmem:[%s6 + $0x2d0] sm:$0xff]
        %v1205 = vld [vmem:[%s6 + $0x2d8] sm:$0xff]
        %v1206 = vld [vmem:[%s6 + $0x2e0] sm:$0xff]
        %v1207 = vld [vmem:[%s6 + $0x2e8] sm:$0xff]
        %v1208 = vld [vmem:[%s6 + $0x2f0] sm:$0xff]
        %v1209 = vld [vmem:[%s6 + $0x2f8] sm:$0xff]
        %v1210 = vld [vmem:[%s6 + $0x300] sm:$0xff]
        %v1211 = vld [vmem:[%s6 + $0x308] sm:$0xff]
        %v1212 = vld [vmem:[%s6 + $0x310] sm:$0xff]
        %v1213 = vld [vmem:[%s6 + $0x318] sm:$0xff]
        %v1214 = vld [vmem:[%s6 + $0x320] sm:$0xff]
        %v1215 = vld [vmem:[%s6 + $0x328] sm:$0xff]
        %v1216 = vld [vmem:[%s6 + $0x330] sm:$0xff]
        %v1217 = vld [vmem:[%s6 + $0x338] sm:$0xff]
        %v1218 = vld [vmem:[%s6 + $0x340] sm:$0xff]
        %v1219 = vld [vmem:[%s6 + $0x348] sm:$0xff]
        %v1220 = vld [vmem:[%s6 + $0x350] sm:$0xff]
        %v1221 = vld [vmem:[%s6 + $0x358] sm:$0xff]
        %v1222 = vld [vmem:[%s6 + $0x360] sm:$0xff]
        %v1223 = vld [vmem:[%s6 + $0x368] sm:$0xff]
        %v1224 = vld [vmem:[%s6 + $0x370] sm:$0xff]
        %v1225 = vld [vmem:[%s6 + $0x378] sm:$0xff]
        %v1226 = vld [vmem:[%s6 + $0x380] sm:$0xff]
        %v1227 = vld [vmem:[%s6 + $0x388] sm:$0xff]
        %v1228 = vld [vmem:[%s6 + $0x390] sm:$0xff]
        %v1229 = vld [vmem:[%s6 + $0x398] sm:$0xff]
        %v1230 = vld [vmem:[%s6 + $0x3a0] sm:$0xff]
        %v1231 = vld [vmem:[%s6 + $0x3a8] sm:$0xff]
        %v1232 = vld [vmem:[%s6 + $0x3b0] sm:$0xff]
        %v1233 = vld [vmem:[%s6 + $0x3b8] sm:$0xff]
        %v1234 = vld [vmem:[%s6 + $0x3c0] sm:$0xff]
        %v1235 = vld [vmem:[%s6 + $0x3c8] sm:$0xff]
        %v1236 = vld [vmem:[%s6 + $0x3d0] sm:$0xff]
        %v1237 = vld [vmem:[%s6 + $0x3d8] sm:$0xff]
        %v1238 = vld [vmem:[%s6 + $0x3e0] sm:$0xff]
        %v1239 = vld [vmem:[%s6 + $0x3e8] sm:$0xff]
        %v1240 = vld [vmem:[%s6 + $0x3f0] sm:$0xff]
        %v1241 = vld [vmem:[%s6 + $0x3f8] sm:$0xff]
        %v1370 = vunpack.c.l.b16 %v1114
        %v1371 = vunpack.c.h.b16 %v1114
        %v1372 = vunpack.c.l.b16 %v1115
        %v1373 = vunpack.c.h.b16 %v1115
        %v1374 = vunpack.c.l.b16 %v1116
        %v1375 = vunpack.c.h.b16 %v1116
        %v1376 = vunpack.c.l.b16 %v1117
        %v1377 = vunpack.c.h.b16 %v1117
        %v1378 = vunpack.c.l.b16 %v1118
        %v1379 = vunpack.c.h.b16 %v1118
        %v1380 = vunpack.c.l.b16 %v1119
        %v1381 = vunpack.c.h.b16 %v1119
        %v1382 = vunpack.c.l.b16 %v1120
        %v1383 = vunpack.c.h.b16 %v1120
        %v1384 = vunpack.c.l.b16 %v1121
        %v1385 = vunpack.c.h.b16 %v1121
        %v1386 = vunpack.c.l.b16 %v1122
        %v1387 = vunpack.c.h.b16 %v1122
        %v1388 = vunpack.c.l.b16 %v1123
        %v1389 = vunpack.c.h.b16 %v1123
        %v1390 = vunpack.c.l.b16 %v1124
        %v1391 = vunpack.c.h.b16 %v1124
        %v1392 = vunpack.c.l.b16 %v1125
        %v1393 = vunpack.c.h.b16 %v1125
        %v1394 = vunpack.c.l.b16 %v1126
        %v1395 = vunpack.c.h.b16 %v1126
        %v1396 = vunpack.c.l.b16 %v1127
        %v1397 = vunpack.c.h.b16 %v1127
        %v1398 = vunpack.c.l.b16 %v1128
        %v1399 = vunpack.c.h.b16 %v1128
        %v1400 = vunpack.c.l.b16 %v1129
        %v1401 = vunpack.c.h.b16 %v1129
        %v1402 = vunpack.c.l.b16 %v1130
        %v1403 = vunpack.c.h.b16 %v1130
        %v1404 = vunpack.c.l.b16 %v1131
        %v1405 = vunpack.c.h.b16 %v1131
        %v1406 = vunpack.c.l.b16 %v1132
        %v1407 = vunpack.c.h.b16 %v1132
        %v1408 = vunpack.c.l.b16 %v1133
        %v1409 = vunpack.c.h.b16 %v1133
        %v1410 = vunpack.c.l.b16 %v1134
        %v1411 = vunpack.c.h.b16 %v1134
        %v1412 = vunpack.c.l.b16 %v1135
        %v1413 = vunpack.c.h.b16 %v1135
        %v1414 = vunpack.c.l.b16 %v1136
        %v1415 = vunpack.c.h.b16 %v1136
        %v1416 = vunpack.c.l.b16 %v1137
        %v1417 = vunpack.c.h.b16 %v1137
        %v1418 = vunpack.c.l.b16 %v1138
        %v1419 = vunpack.c.h.b16 %v1138
        %v1420 = vunpack.c.l.b16 %v1139
        %v1421 = vunpack.c.h.b16 %v1139
        %v1422 = vunpack.c.l.b16 %v1140
        %v1423 = vunpack.c.h.b16 %v1140
        %v1424 = vunpack.c.l.b16 %v1141
        %v1425 = vunpack.c.h.b16 %v1141
        %v1426 = vunpack.c.l.b16 %v1142
        %v1427 = vunpack.c.h.b16 %v1142
        %v1428 = vunpack.c.l.b16 %v1143
        %v1429 = vunpack.c.h.b16 %v1143
        %v1430 = vunpack.c.l.b16 %v1144
        %v1431 = vunpack.c.h.b16 %v1144
        %v1432 = vunpack.c.l.b16 %v1145
        %v1433 = vunpack.c.h.b16 %v1145
        %v1434 = vunpack.c.l.b16 %v1146
        %v1435 = vunpack.c.h.b16 %v1146
        %v1436 = vunpack.c.l.b16 %v1147
        %v1437 = vunpack.c.h.b16 %v1147
        %v1438 = vunpack.c.l.b16 %v1148
        %v1439 = vunpack.c.h.b16 %v1148
        %v1440 = vunpack.c.l.b16 %v1149
        %v1441 = vunpack.c.h.b16 %v1149
        %v1442 = vunpack.c.l.b16 %v1150
        %v1443 = vunpack.c.h.b16 %v1150
        %v1444 = vunpack.c.l.b16 %v1151
        %v1445 = vunpack.c.h.b16 %v1151
        %v1446 = vunpack.c.l.b16 %v1152
        %v1447 = vunpack.c.h.b16 %v1152
        %v1448 = vunpack.c.l.b16 %v1153
        %v1449 = vunpack.c.h.b16 %v1153
        %v1450 = vunpack.c.l.b16 %v1154
        %v1451 = vunpack.c.h.b16 %v1154
        %v1452 = vunpack.c.l.b16 %v1155
        %v1453 = vunpack.c.h.b16 %v1155
        %v1454 = vunpack.c.l.b16 %v1156
        %v1455 = vunpack.c.h.b16 %v1156
        %v1456 = vunpack.c.l.b16 %v1157
        %v1457 = vunpack.c.h.b16 %v1157
        %v1458 = vunpack.c.l.b16 %v1158
        %v1459 = vunpack.c.h.b16 %v1158
        %v1460 = vunpack.c.l.b16 %v1159
        %v1461 = vunpack.c.h.b16 %v1159
        %v1462 = vunpack.c.l.b16 %v1160
        %v1463 = vunpack.c.h.b16 %v1160
        %v1464 = vunpack.c.l.b16 %v1161
        %v1465 = vunpack.c.h.b16 %v1161
        %v1466 = vunpack.c.l.b16 %v1162
        %v1467 = vunpack.c.h.b16 %v1162
        %v1468 = vunpack.c.l.b16 %v1163
        %v1469 = vunpack.c.h.b16 %v1163
        %v1470 = vunpack.c.l.b16 %v1164
        %v1471 = vunpack.c.h.b16 %v1164
        %v1472 = vunpack.c.l.b16 %v1165
        %v1473 = vunpack.c.h.b16 %v1165
        %v1474 = vunpack.c.l.b16 %v1166
        %v1475 = vunpack.c.h.b16 %v1166
        %v1476 = vunpack.c.l.b16 %v1167
        %v1477 = vunpack.c.h.b16 %v1167
        %v1478 = vunpack.c.l.b16 %v1168
        %v1479 = vunpack.c.h.b16 %v1168
        %v1480 = vunpack.c.l.b16 %v1169
        %v1481 = vunpack.c.h.b16 %v1169
        %v1482 = vunpack.c.l.b16 %v1170
        %v1483 = vunpack.c.h.b16 %v1170
        %v1484 = vunpack.c.l.b16 %v1171
        %v1485 = vunpack.c.h.b16 %v1171
        %v1486 = vunpack.c.l.b16 %v1172
        %v1487 = vunpack.c.h.b16 %v1172
        %v1488 = vunpack.c.l.b16 %v1173
        %v1489 = vunpack.c.h.b16 %v1173
        %v1490 = vunpack.c.l.b16 %v1174
        %v1491 = vunpack.c.h.b16 %v1174
        %v1492 = vunpack.c.l.b16 %v1175
        %v1493 = vunpack.c.h.b16 %v1175
        %v1494 = vunpack.c.l.b16 %v1176
        %v1495 = vunpack.c.h.b16 %v1176
        %v1496 = vunpack.c.l.b16 %v1177
        %v1497 = vunpack.c.h.b16 %v1177
        %v1498 = vunpack.c.l.b16 %v1178
        %v1499 = vunpack.c.h.b16 %v1178
        %v1500 = vunpack.c.l.b16 %v1179
        %v1501 = vunpack.c.h.b16 %v1179
        %v1502 = vunpack.c.l.b16 %v1180
        %v1503 = vunpack.c.h.b16 %v1180
        %v1504 = vunpack.c.l.b16 %v1181
        %v1505 = vunpack.c.h.b16 %v1181
        %v1506 = vunpack.c.l.b16 %v1182
        %v1507 = vunpack.c.h.b16 %v1182
        %v1508 = vunpack.c.l.b16 %v1183
        %v1509 = vunpack.c.h.b16 %v1183
        %v1510 = vunpack.c.l.b16 %v1184
        %v1511 = vunpack.c.h.b16 %v1184
        %v1512 = vunpack.c.l.b16 %v1185
        %v1513 = vunpack.c.h.b16 %v1185
        %v1514 = vunpack.c.l.b16 %v1186
        %v1515 = vunpack.c.h.b16 %v1186
        %v1516 = vunpack.c.l.b16 %v1187
        %v1517 = vunpack.c.h.b16 %v1187
        %v1518 = vunpack.c.l.b16 %v1188
        %v1519 = vunpack.c.h.b16 %v1188
        %v1520 = vunpack.c.l.b16 %v1189
        %v1521 = vunpack.c.h.b16 %v1189
        %v1522 = vunpack.c.l.b16 %v1190
        %v1523 = vunpack.c.h.b16 %v1190
        %v1524 = vunpack.c.l.b16 %v1191
        %v1525 = vunpack.c.h.b16 %v1191
        %v1526 = vunpack.c.l.b16 %v1192
        %v1527 = vunpack.c.h.b16 %v1192
        %v1528 = vunpack.c.l.b16 %v1193
        %v1529 = vunpack.c.h.b16 %v1193
        %v1530 = vunpack.c.l.b16 %v1194
        %v1531 = vunpack.c.h.b16 %v1194
        %v1532 = vunpack.c.l.b16 %v1195
        %v1533 = vunpack.c.h.b16 %v1195
        %v1534 = vunpack.c.l.b16 %v1196
        %v1535 = vunpack.c.h.b16 %v1196
        %v1536 = vunpack.c.l.b16 %v1197
        %v1537 = vunpack.c.h.b16 %v1197
        %v1538 = vunpack.c.l.b16 %v1198
        %v1539 = vunpack.c.h.b16 %v1198
        %v1540 = vunpack.c.l.b16 %v1199
        %v1541 = vunpack.c.h.b16 %v1199
        %v1542 = vunpack.c.l.b16 %v1200
        %v1543 = vunpack.c.h.b16 %v1200
        %v1544 = vunpack.c.l.b16 %v1201
        %v1545 = vunpack.c.h.b16 %v1201
        %v1546 = vunpack.c.l.b16 %v1202
        %v1547 = vunpack.c.h.b16 %v1202
        %v1548 = vunpack.c.l.b16 %v1203
        %v1549 = vunpack.c.h.b16 %v1203
        %v1550 = vunpack.c.l.b16 %v1204
        %v1551 = vunpack.c.h.b16 %v1204
        %v1552 = vunpack.c.l.b16 %v1205
        %v1553 = vunpack.c.h.b16 %v1205
        %v1554 = vunpack.c.l.b16 %v1206
        %v1555 = vunpack.c.h.b16 %v1206
        %v1556 = vunpack.c.l.b16 %v1207
        %v1557 = vunpack.c.h.b16 %v1207
        %v1558 = vunpack.c.l.b16 %v1208
        %v1559 = vunpack.c.h.b16 %v1208
        %v1560 = vunpack.c.l.b16 %v1209
        %v1561 = vunpack.c.h.b16 %v1209
        %v1562 = vunpack.c.l.b16 %v1210
        %v1563 = vunpack.c.h.b16 %v1210
        %v1564 = vunpack.c.l.b16 %v1211
        %v1565 = vunpack.c.h.b16 %v1211
        %v1566 = vunpack.c.l.b16 %v1212
        %v1567 = vunpack.c.h.b16 %v1212
        %v1568 = vunpack.c.l.b16 %v1213
        %v1569 = vunpack.c.h.b16 %v1213
        %v1570 = vunpack.c.l.b16 %v1214
        %v1571 = vunpack.c.h.b16 %v1214
        %v1572 = vunpack.c.l.b16 %v1215
        %v1573 = vunpack.c.h.b16 %v1215
        %v1574 = vunpack.c.l.b16 %v1216
        %v1575 = vunpack.c.h.b16 %v1216
        %v1576 = vunpack.c.l.b16 %v1217
        %v1577 = vunpack.c.h.b16 %v1217
        %v1578 = vunpack.c.l.b16 %v1218
        %v1579 = vunpack.c.h.b16 %v1218
        %v1580 = vunpack.c.l.b16 %v1219
        %v1581 = vunpack.c.h.b16 %v1219
        %v1582 = vunpack.c.l.b16 %v1220
        %v1583 = vunpack.c.h.b16 %v1220
        %v1584 = vunpack.c.l.b16 %v1221
        %v1585 = vunpack.c.h.b16 %v1221
        %v1586 = vunpack.c.l.b16 %v1222
        %v1587 = vunpack.c.h.b16 %v1222
        %v1588 = vunpack.c.l.b16 %v1223
        %v1589 = vunpack.c.h.b16 %v1223
        %v1590 = vunpack.c.l.b16 %v1224
        %v1591 = vunpack.c.h.b16 %v1224
        %v1592 = vunpack.c.l.b16 %v1225
        %v1593 = vunpack.c.h.b16 %v1225
        %v1594 = vunpack.c.l.b16 %v1226
        %v1595 = vunpack.c.h.b16 %v1226
        %v1596 = vunpack.c.l.b16 %v1227
        %v1597 = vunpack.c.h.b16 %v1227
        %v1598 = vunpack.c.l.b16 %v1228
        %v1599 = vunpack.c.h.b16 %v1228
        %v1600 = vunpack.c.l.b16 %v1229
        %v1601 = vunpack.c.h.b16 %v1229
        %v1602 = vunpack.c.l.b16 %v1230
        %v1603 = vunpack.c.h.b16 %v1230
        %v1604 = vunpack.c.l.b16 %v1231
        %v1605 = vunpack.c.h.b16 %v1231
        %v1606 = vunpack.c.l.b16 %v1232
        %v1607 = vunpack.c.h.b16 %v1232
        %v1608 = vunpack.c.l.b16 %v1233
        %v1609 = vunpack.c.h.b16 %v1233
        %v1610 = vunpack.c.l.b16 %v1234
        %v1611 = vunpack.c.h.b16 %v1234
        %v1612 = vunpack.c.l.b16 %v1235
        %v1613 = vunpack.c.h.b16 %v1235
        %v1614 = vunpack.c.l.b16 %v1236
        %v1615 = vunpack.c.h.b16 %v1236
        %v1616 = vunpack.c.l.b16 %v1237
        %v1617 = vunpack.c.h.b16 %v1237
        %v1618 = vunpack.c.l.b16 %v1238
        %v1619 = vunpack.c.h.b16 %v1238
        %v1620 = vunpack.c.l.b16 %v1239
        %v1621 = vunpack.c.h.b16 %v1239
        %v1622 = vunpack.c.l.b16 %v1240
        %v1623 = vunpack.c.h.b16 %v1240
        %v1624 = vunpack.c.l.b16 %v1241
        %v1625 = vunpack.c.h.b16 %v1241
        %v1626 = vpack.c.b16 %v1378, %v1370
        %v1627 = vpack.c.b16 %v1379, %v1371
        %v1628 = vpack.c.b16 %v1380, %v1372
        %v1629 = vpack.c.b16 %v1381, %v1373
        %v1630 = vpack.c.b16 %v1382, %v1374
        %v1631 = vpack.c.b16 %v1383, %v1375
        %v1632 = vpack.c.b16 %v1384, %v1376
        %v1633 = vpack.c.b16 %v1385, %v1377
        %v1634 = vpack.c.b16 %v1394, %v1386
        %v1635 = vpack.c.b16 %v1395, %v1387
        %v1636 = vpack.c.b16 %v1396, %v1388
        %v1637 = vpack.c.b16 %v1397, %v1389
        %v1638 = vpack.c.b16 %v1398, %v1390
        %v1639 = vpack.c.b16 %v1399, %v1391
        %v1640 = vpack.c.b16 %v1400, %v1392
        %v1641 = vpack.c.b16 %v1401, %v1393
        %v1642 = vpack.c.b16 %v1410, %v1402
        %v1643 = vpack.c.b16 %v1411, %v1403
        %v1644 = vpack.c.b16 %v1412, %v1404
        %v1645 = vpack.c.b16 %v1413, %v1405
        %v1646 = vpack.c.b16 %v1414, %v1406
        %v1647 = vpack.c.b16 %v1415, %v1407
        %v1648 = vpack.c.b16 %v1416, %v1408
        %v1649 = vpack.c.b16 %v1417, %v1409
        %v1650 = vpack.c.b16 %v1426, %v1418
        %v1651 = vpack.c.b16 %v1427, %v1419
        %v1652 = vpack.c.b16 %v1428, %v1420
        %v1653 = vpack.c.b16 %v1429, %v1421
        %v1654 = vpack.c.b16 %v1430, %v1422
        %v1655 = vpack.c.b16 %v1431, %v1423
        %v1656 = vpack.c.b16 %v1432, %v1424
        %v1657 = vpack.c.b16 %v1433, %v1425
        %v1658 = vpack.c.b16 %v1442, %v1434
        %v1659 = vpack.c.b16 %v1443, %v1435
        %v1660 = vpack.c.b16 %v1444, %v1436
        %v1661 = vpack.c.b16 %v1445, %v1437
        %v1662 = vpack.c.b16 %v1446, %v1438
        %v1663 = vpack.c.b16 %v1447, %v1439
        %v1664 = vpack.c.b16 %v1448, %v1440
        %v1665 = vpack.c.b16 %v1449, %v1441
        %v1666 = vpack.c.b16 %v1458, %v1450
        %v1667 = vpack.c.b16 %v1459, %v1451
        %v1668 = vpack.c.b16 %v1460, %v1452
        %v1669 = vpack.c.b16 %v1461, %v1453
        %v1670 = vpack.c.b16 %v1462, %v1454
        %v1671 = vpack.c.b16 %v1463, %v1455
        %v1672 = vpack.c.b16 %v1464, %v1456
        %v1673 = vpack.c.b16 %v1465, %v1457
        %v1674 = vpack.c.b16 %v1474, %v1466
        %v1675 = vpack.c.b16 %v1475, %v1467
        %v1676 = vpack.c.b16 %v1476, %v1468
        %v1677 = vpack.c.b16 %v1477, %v1469
        %v1678 = vpack.c.b16 %v1478, %v1470
        %v1679 = vpack.c.b16 %v1479, %v1471
        %v1680 = vpack.c.b16 %v1480, %v1472
        %v1681 = vpack.c.b16 %v1481, %v1473
        %v1682 = vpack.c.b16 %v1490, %v1482
        %v1683 = vpack.c.b16 %v1491, %v1483
        %v1684 = vpack.c.b16 %v1492, %v1484
        %v1685 = vpack.c.b16 %v1493, %v1485
        %v1686 = vpack.c.b16 %v1494, %v1486
        %v1687 = vpack.c.b16 %v1495, %v1487
        %v1688 = vpack.c.b16 %v1496, %v1488
        %v1689 = vpack.c.b16 %v1497, %v1489
        %v1690 = vpack.c.b16 %v1506, %v1498
        %v1691 = vpack.c.b16 %v1507, %v1499
        %v1692 = vpack.c.b16 %v1508, %v1500
        %v1693 = vpack.c.b16 %v1509, %v1501
        %v1694 = vpack.c.b16 %v1510, %v1502
        %v1695 = vpack.c.b16 %v1511, %v1503
        %v1696 = vpack.c.b16 %v1512, %v1504
        %v1697 = vpack.c.b16 %v1513, %v1505
        %v1698 = vpack.c.b16 %v1522, %v1514
        %v1699 = vpack.c.b16 %v1523, %v1515
        %v1700 = vpack.c.b16 %v1524, %v1516
        %v1701 = vpack.c.b16 %v1525, %v1517
        %v1702 = vpack.c.b16 %v1526, %v1518
        %v1703 = vpack.c.b16 %v1527, %v1519
        %v1704 = vpack.c.b16 %v1528, %v1520
        %v1705 = vpack.c.b16 %v1529, %v1521
        %v1706 = vpack.c.b16 %v1538, %v1530
        %v1707 = vpack.c.b16 %v1539, %v1531
        %v1708 = vpack.c.b16 %v1540, %v1532
        %v1709 = vpack.c.b16 %v1541, %v1533
        %v1710 = vpack.c.b16 %v1542, %v1534
        %v1711 = vpack.c.b16 %v1543, %v1535
        %v1712 = vpack.c.b16 %v1544, %v1536
        %v1713 = vpack.c.b16 %v1545, %v1537
        %v1714 = vpack.c.b16 %v1554, %v1546
        %v1715 = vpack.c.b16 %v1555, %v1547
        %v1716 = vpack.c.b16 %v1556, %v1548
        %v1717 = vpack.c.b16 %v1557, %v1549
        %v1718 = vpack.c.b16 %v1558, %v1550
        %v1719 = vpack.c.b16 %v1559, %v1551
        %v1720 = vpack.c.b16 %v1560, %v1552
        %v1721 = vpack.c.b16 %v1561, %v1553
        %v1722 = vpack.c.b16 %v1570, %v1562
        %v1723 = vpack.c.b16 %v1571, %v1563
        %v1724 = vpack.c.b16 %v1572, %v1564
        %v1725 = vpack.c.b16 %v1573, %v1565
        %v1726 = vpack.c.b16 %v1574, %v1566
        %v1727 = vpack.c.b16 %v1575, %v1567
        %v1728 = vpack.c.b16 %v1576, %v1568
        %v1729 = vpack.c.b16 %v1577, %v1569
        %v1730 = vpack.c.b16 %v1586, %v1578
        %v1731 = vpack.c.b16 %v1587, %v1579
        %v1732 = vpack.c.b16 %v1588, %v1580
        %v1733 = vpack.c.b16 %v1589, %v1581
        %v1734 = vpack.c.b16 %v1590, %v1582
        %v1735 = vpack.c.b16 %v1591, %v1583
        %v1736 = vpack.c.b16 %v1592, %v1584
        %v1737 = vpack.c.b16 %v1593, %v1585
        %v1738 = vpack.c.b16 %v1602, %v1594
        %v1739 = vpack.c.b16 %v1603, %v1595
        %v1740 = vpack.c.b16 %v1604, %v1596
        %v1741 = vpack.c.b16 %v1605, %v1597
        %v1742 = vpack.c.b16 %v1606, %v1598
        %v1743 = vpack.c.b16 %v1607, %v1599
        %v1744 = vpack.c.b16 %v1608, %v1600
        %v1745 = vpack.c.b16 %v1609, %v1601
        %v1746 = vpack.c.b16 %v1618, %v1610
        %v1747 = vpack.c.b16 %v1619, %v1611
        %v1748 = vpack.c.b16 %v1620, %v1612
        %v1749 = vpack.c.b16 %v1621, %v1613
        %v1750 = vpack.c.b16 %v1622, %v1614
        %v1751 = vpack.c.b16 %v1623, %v1615
        %v1752 = vpack.c.b16 %v1624, %v1616
        %v1753 = vpack.c.b16 %v1625, %v1617
        %1882 = vmatprep.subr.bf16.mxu0 %v1627
        %1883 = vmatpush1.bf16.msra.mxu0 %v1626
        %1884 = vmatprep.subr.bf16.mxu0 %v1635
        %1885 = vmatpush1.bf16.msra.mxu0 %v1634
        %1886 = vmatprep.subr.bf16.mxu0 %v1643
        %1887 = vmatpush1.bf16.msra.mxu0 %v1642
        %1888 = vmatprep.subr.bf16.mxu0 %v1651
        %1889 = vmatpush1.bf16.msra.mxu0 %v1650
        %1890 = vmatprep.subr.bf16.mxu0 %v1659
        %1891 = vmatpush1.bf16.msra.mxu0 %v1658
        %1892 = vmatprep.subr.bf16.mxu0 %v1667
        %1893 = vmatpush1.bf16.msra.mxu0 %v1666
        %1894 = vmatprep.subr.bf16.mxu0 %v1675
        %1895 = vmatpush1.bf16.msra.mxu0 %v1674
        %1896 = vmatprep.subr.bf16.mxu0 %v1683
        %1897 = vmatpush1.bf16.msra.mxu0 %v1682
        %1898 = vmatprep.subr.bf16.mxu0 %v1691
        %1899 = vmatpush1.bf16.msra.mxu0 %v1690
        %1900 = vmatprep.subr.bf16.mxu0 %v1699
        %1901 = vmatpush1.bf16.msra.mxu0 %v1698
        %1902 = vmatprep.subr.bf16.mxu0 %v1707
        %1903 = vmatpush1.bf16.msra.mxu0 %v1706
        %1904 = vmatprep.subr.bf16.mxu0 %v1715
        %1905 = vmatpush1.bf16.msra.mxu0 %v1714
        %1906 = vmatprep.subr.bf16.mxu0 %v1723
        %1907 = vmatpush1.bf16.msra.mxu0 %v1722
        %1908 = vmatprep.subr.bf16.mxu0 %v1731
        %1909 = vmatpush1.bf16.msra.mxu0 %v1730
        %1910 = vmatprep.subr.bf16.mxu0 %v1739
        %1911 = vmatpush1.bf16.msra.mxu0 %v1738
        %1912 = vmatprep.subr.bf16.mxu0 %v1747
        %1913 = vmatpush1.bf16.msra.mxu0 %v1746
        %1914 = vmatprep.mubr.bf16.mxu0 %v332
        %1915 = vmatmul.mubr.bf16.gmra.mrb[0].mxu0 %v331
        %v1916 = vpop.f32.mrb[0].mxu0
        %v1917 = vadd.f32 0.0, %v1916
        %v1918 = vpop.f32.mrb[0].mxu0
        %v1919 = vadd.f32 0.0, %v1918
        %v1920 = vpop.f32.mrb[0].mxu0
        %v1921 = vpop.f32.mrb[0].mxu0
        %1922 = vdwg.mxu0
        %1923 = vmatprep.subr.bf16.mxu0 %v1629
        %1924 = vmatpush1.bf16.msra.mxu0 %v1628
        %1925 = vmatprep.subr.bf16.mxu0 %v1637
        %1926 = vmatpush1.bf16.msra.mxu0 %v1636
        %1927 = vmatprep.subr.bf16.mxu0 %v1645
        %1928 = vmatpush1.bf16.msra.mxu0 %v1644
        %1929 = vmatprep.subr.bf16.mxu0 %v1653
        %1930 = vmatpush1.bf16.msra.mxu0 %v1652
        %1931 = vmatprep.subr.bf16.mxu0 %v1661
        %1932 = vmatpush1.bf16.msra.mxu0 %v1660
        %1933 = vmatprep.subr.bf16.mxu0 %v1669
        %1934 = vmatpush1.bf16.msra.mxu0 %v1668
        %1935 = vmatprep.subr.bf16.mxu0 %v1677
        %1936 = vmatpush1.bf16.msra.mxu0 %v1676
        %1937 = vmatprep.subr.bf16.mxu0 %v1685
        %1938 = vmatpush1.bf16.msra.mxu0 %v1684
        %1939 = vmatprep.subr.bf16.mxu0 %v1693
        %1940 = vmatpush1.bf16.msra.mxu0 %v1692
        %1941 = vmatprep.subr.bf16.mxu0 %v1701
        %1942 = vmatpush1.bf16.msra.mxu0 %v1700
        %1943 = vmatprep.subr.bf16.mxu0 %v1709
        %1944 = vmatpush1.bf16.msra.mxu0 %v1708
        %1945 = vmatprep.subr.bf16.mxu0 %v1717
        %1946 = vmatpush1.bf16.msra.mxu0 %v1716
        %1947 = vmatprep.subr.bf16.mxu0 %v1725
        %1948 = vmatpush1.bf16.msra.mxu0 %v1724
        %1949 = vmatprep.subr.bf16.mxu0 %v1733
        %1950 = vmatpush1.bf16.msra.mxu0 %v1732
        %1951 = vmatprep.subr.bf16.mxu0 %v1741
        %1952 = vmatpush1.bf16.msra.mxu0 %v1740
        %1953 = vmatprep.subr.bf16.mxu0 %v1749
        %1954 = vmatpush1.bf16.msra.mxu0 %v1748
        %1955 = vmatprep.mubr.bf16.mxu0 %v332
        %1956 = vmatmul.mubr.bf16.gmra.mrb[0].mxu0 %v331
        %v1957 = vpop.f32.mrb[0].mxu0
        %v1958 = vadd.f32 0.0, %v1957
        %v1959 = vpop.f32.mrb[0].mxu0
        %v1960 = vadd.f32 0.0, %v1959
        %v1961 = vpop.f32.mrb[0].mxu0
        %v1962 = vpop.f32.mrb[0].mxu0
        %1963 = vdwg.mxu0
        %1964 = vmatprep.subr.bf16.mxu0 %v1631
        %1965 = vmatpush1.bf16.msra.mxu0 %v1630
        %1966 = vmatprep.subr.bf16.mxu0 %v1639
        %1967 = vmatpush1.bf16.msra.mxu0 %v1638
        %1968 = vmatprep.subr.bf16.mxu0 %v1647
        %1969 = vmatpush1.bf16.msra.mxu0 %v1646
        %1970 = vmatprep.subr.bf16.mxu0 %v1655
        %1971 = vmatpush1.bf16.msra.mxu0 %v1654
        %1972 = vmatprep.subr.bf16.mxu0 %v1663
        %1973 = vmatpush1.bf16.msra.mxu0 %v1662
        %1974 = vmatprep.subr.bf16.mxu0 %v1671
        %1975 = vmatpush1.bf16.msra.mxu0 %v1670
        %1976 = vmatprep.subr.bf16.mxu0 %v1679
        %1977 = vmatpush1.bf16.msra.mxu0 %v1678
        %1978 = vmatprep.subr.bf16.mxu0 %v1687
        %1979 = vmatpush1.bf16.msra.mxu0 %v1686
        %1980 = vmatprep.subr.bf16.mxu0 %v1695
        %1981 = vmatpush1.bf16.msra.mxu0 %v1694
        %1982 = vmatprep.subr.bf16.mxu0 %v1703
        %1983 = vmatpush1.bf16.msra.mxu0 %v1702
        %1984 = vmatprep.subr.bf16.mxu0 %v1711
        %1985 = vmatpush1.bf16.msra.mxu0 %v1710
        %1986 = vmatprep.subr.bf16.mxu0 %v1719
        %1987 = vmatpush1.bf16.msra.mxu0 %v1718
        %1988 = vmatprep.subr.bf16.mxu0 %v1727
        %1989 = vmatpush1.bf16.msra.mxu0 %v1726
        %1990 = vmatprep.subr.bf16.mxu0 %v1735
        %1991 = vmatpush1.bf16.msra.mxu0 %v1734
        %1992 = vmatprep.subr.bf16.mxu0 %v1743
        %1993 = vmatpush1.bf16.msra.mxu0 %v1742
        %1994 = vmatprep.subr.bf16.mxu0 %v1751
        %1995 = vmatpush1.bf16.msra.mxu0 %v1750
        %1996 = vmatprep.mubr.bf16.mxu0 %v332
        %1997 = vmatmul.mubr.bf16.gmra.mrb[0].mxu0 %v331
        %v1998 = vpop.f32.mrb[0].mxu0
        %v1999 = vadd.f32 0.0, %v1998
        %v2000 = vpop.f32.mrb[0].mxu0
        %v2001 = vadd.f32 0.0, %v2000
        %v2002 = vpop.f32.mrb[0].mxu0
        %v2003 = vpop.f32.mrb[0].mxu0
        %2004 = vdwg.mxu0
        %2005 = vmatprep.subr.bf16.mxu0 %v1633
        %2006 = vmatpush1.bf16.msra.mxu0 %v1632
        %2007 = vmatprep.subr.bf16.mxu0 %v1641
        %2008 = vmatpush1.bf16.msra.mxu0 %v1640
        %2009 = vmatprep.subr.bf16.mxu0 %v1649
        %2010 = vmatpush1.bf16.msra.mxu0 %v1648
        %2011 = vmatprep.subr.bf16.mxu0 %v1657
        %2012 = vmatpush1.bf16.msra.mxu0 %v1656
        %2013 = vmatprep.subr.bf16.mxu0 %v1665
        %2014 = vmatpush1.bf16.msra.mxu0 %v1664
        %2015 = vmatprep.subr.bf16.mxu0 %v1673
        %2016 = vmatpush1.bf16.msra.mxu0 %v1672
        %2017 = vmatprep.subr.bf16.mxu0 %v1681
        %2018 = vmatpush1.bf16.msra.mxu0 %v1680
        %2019 = vmatprep.subr.bf16.mxu0 %v1689
        %2020 = vmatpush1.bf16.msra.mxu0 %v1688
        %2021 = vmatprep.subr.bf16.mxu0 %v1697
        %2022 = vmatpush1.bf16.msra.mxu0 %v1696
        %2023 = vmatprep.subr.bf16.mxu0 %v1705
        %2024 = vmatpush1.bf16.msra.mxu0 %v1704
        %2025 = vmatprep.subr.bf16.mxu0 %v1713
        %2026 = vmatpush1.bf16.msra.mxu0 %v1712
        %2027 = vmatprep.subr.bf16.mxu0 %v1721
        %2028 = vmatpush1.bf16.msra.mxu0 %v1720
        %2029 = vmatprep.subr.bf16.mxu0 %v1729
        %2030 = vmatpush1.bf16.msra.mxu0 %v1728
        %2031 = vmatprep.subr.bf16.mxu0 %v1737
        %2032 = vmatpush1.bf16.msra.mxu0 %v1736
        %2033 = vmatprep.subr.bf16.mxu0 %v1745
        %2034 = vmatpush1.bf16.msra.mxu0 %v1744
        %2035 = vmatprep.subr.bf16.mxu0 %v1753
        %2036 = vmatpush1.bf16.msra.mxu0 %v1752
        %2037 = vmatprep.mubr.bf16.mxu0 %v332
        %2038 = vmatmul.mubr.bf16.gmra.mrb[0].mxu0 %v331
        %v2039 = vpop.f32.mrb[0].mxu0
        %v2040 = vadd.f32 0.0, %v2039
        %v2041 = vpop.f32.mrb[0].mxu0
        %v2042 = vadd.f32 0.0, %v2041
        %v2043 = vpop.f32.mrb[0].mxu0
        %v2044 = vpop.f32.mrb[0].mxu0
        %2045 = vdwg.mxu0
        %v2046 = vmul.f32 %v897, %v1917
        %v2047 = vmul.f32 %v899, %v1919
        %v2048 = vadd.f32 %v2046, %v2047
        %v2049 = vmul.f32 %v968, %v1958
        %v2050 = vadd.f32 %v2048, %v2049
        %v2051 = vmul.f32 %v970, %v1960
        %v2052 = vadd.f32 %v2050, %v2051
        %v2053 = vmul.f32 %v1039, %v1999
        %v2054 = vadd.f32 %v2052, %v2053
        %v2055 = vmul.f32 %v1041, %v2001
        %v2056 = vadd.f32 %v2054, %v2055
        %v2057 = vmul.f32 %v1110, %v2040
        %v2058 = vadd.f32 %v2056, %v2057
        %v2059 = vmul.f32 %v1112, %v2042
        %v2060 = vadd.f32 %v2058, %v2059
        %2061 = vst [vmem:[%s284] sm:$0xff] %v2060
        %s2062 = sand.u32 %s186, 1
        %s2063 = scalar_lea.sflag [#allocation3], %s2062
        %s2064 = sand.u32 %s186, 1
        %s2065 = smul.addr %s2064, 8
        %s2066 = scalar_lea.vmem [#allocation2], %s2065
        // Predicated region
        $region49: #{global_attention_pallas.1} parent=47 // pred_check
          %p2067 = pneg %p196
        $region50: #{global_attention_pallas.1} parent=47 // pred_check_branch
          %2069 = sbr.rel (%p2067) target = $region52
        $region51: #{global_attention_pallas.1} parent=47 // pred_region
          %s2071 = ssub.s32 128, 128
          %2072 = vsyncadd %s2063, %s2071
          %s2073 = smul.addr %s21, 128
          %s2074 = scalar_lea.hbm %s7, %s2073
          %s2076 = sshll.u32 %s2066, 4
          %s2077 = int_to_ptr.vmem [resolvable:$true] %s2076
          %2079 = dma.vmem_to_hbm [thread:$0]  %s2077, 128, %s2074, %s2063
        $region52: #{global_attention_pallas.1} parent=47 // pred_fallthru
          _
      $region48: #{global_attention_pallas.1} parent=5 // pred_fallthru
        _
      %p2080 = scmp.le.s32.totalorder 2, %s16
      // Predicated region
      $region53: #{global_attention_pallas.1} parent=5 // pred_check
        %p2081 = pneg %p2080
      $region54: #{global_attention_pallas.1} parent=5 // pred_check_branch
        %2083 = sbr.rel (%p2081) target = $region56
      $region55: #{global_attention_pallas.1} parent=5 // pred_region
        %s2084 = ssub.s32 %s16, 2
        // Predicated region
        $region57: #{global_attention_pallas.1} parent=55 // pred_check
          %p2085 = pneg %p202
        $region58: #{global_attention_pallas.1} parent=55 // pred_check_branch
          %2087 = sbr.rel (%p2085) target = $region60
        $region59: #{global_attention_pallas.1} parent=55 // pred_region
          %s2088 = sand.u32 %s187, 1
          %s2089 = scalar_lea.sflag [#allocation3], %s2088
          %s2090 = sand.u32 %s187, 1
          %s2091 = smul.addr %s2090, 8
          %s2092 = scalar_lea.vmem [#allocation2], %s2091
          %2093 = dma.done %s2089, 128
        $region60: #{global_attention_pallas.1} parent=55 // pred_fallthru
          _
      $region56: #{global_attention_pallas.1} parent=5 // pred_fallthru
        _
    $region6: #{global_attention_pallas.1} parent=1 // loop_footer
      %s20 = sadd.s32 1, %s16
    $region7: #{global_attention_pallas.1} parent=1 // loop_footer_branch
      %15 = sbr.rel target = $region3
    $region8: #{global_attention_pallas.1} parent=1 // loop_exit
      _
    %2094 = vsyncpa [#allocation3], 1
    %s2095 = scalar_lea.sflag [#allocation3], 1
    %2096 = vsyncpa %s2095, 1

</llo_original>
